<compile_context>
chip_gen: v5e
topology: v5e:2x2
jax: 0.10.0
libtpu: 0.0.40
codegen_flags: <defaults>
</compile_context>

<pallas_src>
import math
import numpy as np
import jax
import jax.numpy as jnp
from jax.experimental import pallas as pl

# ---------------- config ----------------
D_MODEL    = 32
Q_HEADS    = 4
KV_HEADS   = 2
HEAD_DIM   = D_MODEL // Q_HEADS          # 8
D_KV       = KV_HEADS * HEAD_DIM         # 16
N_REP      = Q_HEADS // KV_HEADS         # 2
FF_DIM     = 64
VOCAB      = 64
PAD_ID     = 0
NUM_LAYERS = 2
SEQ        = 8
BATCH      = 2
ALIBI_MAX  = 8
EPS        = 1e-5
SCALE      = 1.0 / math.sqrt(HEAD_DIM)


# ---------------- in-kernel helpers ----------------
def _layernorm(x, w, b):
    mu = jnp.mean(x, axis=-1, keepdims=True)
    var = jnp.mean((x - mu) ** 2, axis=-1, keepdims=True)
    return (x - mu) * jax.lax.rsqrt(var + EPS) * w + b


# ---------------- single fused forward kernel ----------------
def fused_encoder_kernel(x_ref, bias_ref,
                         ln1w_ref, ln1b_ref,
                         wq_ref, bq_ref, wk_ref, bk_ref, wv_ref, bv_ref,
                         wo_ref, bo_ref,
                         ln2w_ref, ln2b_ref,
                         wg_ref, wu_ref, wd_ref,
                         fnw_ref, fnb_ref,
                         out_ref, probs_ref):
    x = x_ref[...]                                   # (BS, D)   batch folded into matmul rows
    bias = bias_ref[...]                             # (B*G, NR*S, S) grouped alibi, constant

    for l in range(NUM_LAYERS):                      # unrolled (2 layers; use fori_loop if deeper)
        # --- pre-norm + QKV projections on the full (BS, D) row slab ---
        a = _layernorm(x, ln1w_ref[l], ln1b_ref[l])
        q = jnp.dot(a, wq_ref[l], preferred_element_type=jnp.float32) + bq_ref[l]
        k = jnp.dot(a, wk_ref[l], preferred_element_type=jnp.float32) + bk_ref[l]
        v = jnp.dot(a, wv_ref[l], preferred_element_type=jnp.float32) + bv_ref[l]

        # --- group by (batch, kv-head); q rows ordered (rep, seq) within a group ---
        # k/v of each kv head are sliced exactly once (no h//n_rep duplication).
        q3 = jnp.stack([
            jnp.concatenate(
                [q[b * SEQ:(b + 1) * SEQ,
                   (g * N_REP + r) * HEAD_DIM:(g * N_REP + r + 1) * HEAD_DIM]
                 for r in range(N_REP)], axis=0)                       # (NR*S, hd)
            for b in range(BATCH) for g in range(KV_HEADS)], axis=0)    # (B*G, NR*S, hd)
        k3 = jnp.stack([
            k[b * SEQ:(b + 1) * SEQ, g * HEAD_DIM:(g + 1) * HEAD_DIM]
            for b in range(BATCH) for g in range(KV_HEADS)], axis=0)    # (B*G, S, hd)
        v3 = jnp.stack([
            v[b * SEQ:(b + 1) * SEQ, g * HEAD_DIM:(g + 1) * HEAD_DIM]
            for b in range(BATCH) for g in range(KV_HEADS)], axis=0)    # (B*G, S, hd)

        # --- per-batch, per-group attention (alibi bias, non-causal) ---
        scores = jnp.einsum('nqd,nkd->nqk', q3, k3,
                            preferred_element_type=jnp.float32) * SCALE + bias
        m = jnp.max(scores, axis=-1, keepdims=True)
        e = jnp.exp(scores - m)
        p = e * pl.reciprocal(jnp.sum(e, axis=-1, keepdims=True), approx=True)
        probs_ref[l] = p                                                 # one store / layer
        ctx = jnp.einsum('nqk,nkd->nqd', p, v3,
                         preferred_element_type=jnp.float32)             # (B*G, NR*S, hd)

        # --- output projection fused with the head reduction (no lane concat):
        #     attn = sum_h ctx_h @ Wo[h]  accumulated in the MXU f32 accumulator ---
        attn = bo_ref[l]                                                 # (1, D) -> broadcasts
        for g in range(KV_HEADS):
            for r in range(N_REP):
                h = g * N_REP + r
                ctx_h = jnp.concatenate(
                    [ctx[b * KV_HEADS + g, r * SEQ:(r + 1) * SEQ, :]
                     for b in range(BATCH)], axis=0)                     # (BS, hd)
                attn = attn + jnp.dot(ctx_h, wo_ref[l, h],
                                      preferred_element_type=jnp.float32)
        x = x + attn                                                     # residual (dropout=0)

        # --- pre-norm + SwiGLU MLP ---
        mn = _layernorm(x, ln2w_ref[l], ln2b_ref[l])
        gate = jnp.dot(mn, wg_ref[l], preferred_element_type=jnp.float32)
        gate = gate * jax.nn.sigmoid(gate)                               # SiLU
        up = jnp.dot(mn, wu_ref[l], preferred_element_type=jnp.float32)
        x = x + jnp.dot(gate * up, wd_ref[l], preferred_element_type=jnp.float32)

    out_ref[...] = _layernorm(x, fnw_ref[...], fnb_ref[...])


# ---------------- alibi bias (matches build_attn_bias for 'torch', non-causal) ----------------
def build_alibi_np(n_heads, seq_len, alibi_bias_max=8):
    _n = 2 ** math.ceil(math.log2(n_heads))
    m = np.arange(1, _n + 1, dtype=np.float32) * (alibi_bias_max / _n)
    slopes = (1.0 / np.power(2.0, m)).astype(np.float32)
    if _n != n_heads:
        slopes = np.concatenate([slopes[1::2], slopes[::2]])[:n_heads]
    rel = np.arange(1 - seq_len, 1, dtype=np.float32)
    bias = -np.abs(rel[None, :] - rel[:, None])                          # (S, S) full (non-causal)
    return (bias[None, :, :] * slopes[:, None, None]).astype(np.float32)  # (H, S, S)


def build_grouped_bias_np(batch):
    """(B*G, NR*S, S) bias matching the kernel's (batch, kv-head, (rep, seq)) grouping."""
    alibi = build_alibi_np(Q_HEADS, SEQ, ALIBI_MAX)                      # (H, S, S), h = g*NR + r
    bias_g = alibi.reshape(KV_HEADS, N_REP * SEQ, SEQ)                   # rows ordered (r, s)
    return np.tile(bias_g[None], (batch, 1, 1, 1)).reshape(
        batch * KV_HEADS, N_REP * SEQ, SEQ)                              # n = b*G + g


# ---------------- one-time parameter prep (outside the jitted per-call path) ----------------
def prepare_params(layers):
    stacked = [jnp.stack(p, axis=0) for p in zip(*layers)]
    # Wo (L, D, D) -> (L, H, hd, D): head reduction happens in the MXU accumulator.
    stacked[8] = stacked[8].reshape(NUM_LAYERS, Q_HEADS, HEAD_DIM, D_MODEL)
    bias = jnp.asarray(build_grouped_bias_np(BATCH))                     # compile-time constant data
    return tuple(stacked), bias


# ---------------- full forward (one Pallas call) ----------------
def transformer_encoder(enc_inputs, emb, stacked, bias, normf_w, normf_b):
    B, S = enc_inputs.shape
    x = emb[enc_inputs].reshape(B * S, D_MODEL)                          # embedding gather (glue)

    out_shape = (
        jax.ShapeDtypeStruct((B * S, D_MODEL), jnp.float32),
        jax.ShapeDtypeStruct((NUM_LAYERS, B * KV_HEADS, N_REP * S, S), jnp.float32),
    )
    out_flat, probs = pl.pallas_call(fused_encoder_kernel, out_shape=out_shape)(
        x, bias, *stacked, normf_w, normf_b)

    out = out_flat.reshape(B, S, D_MODEL)
    # (L, B*G, NR*S, S) -> (L, B, G, NR, S, S) -> (L, B, H, S, S) with h = g*NR + r
    p = probs.reshape(NUM_LAYERS, B, KV_HEADS, N_REP, S, S).reshape(
        NUM_LAYERS, B, Q_HEADS, S, S)
    all_attn_weights = [p[l] for l in range(NUM_LAYERS)]
    return out, all_attn_weights


# ---------------- parameter init (deterministic, synthetic) ----------------
def init_params(key):
    keys = iter(jax.random.split(key, 4 + NUM_LAYERS * 16))

    def nrm(shape, scale=0.02):
        return scale * jax.random.normal(next(keys), shape, dtype=jnp.float32)

    emb = nrm((VOCAB, D_MODEL), 1.0)
    emb = emb.at[PAD_ID].set(0.0)   # nn.Embedding padding_idx row is zero at init
    layers = []
    for _ in range(NUM_LAYERS):
        layers.append((
            jnp.ones((1, D_MODEL), jnp.float32), jnp.zeros((1, D_MODEL), jnp.float32),   # ln1
            nrm((D_MODEL, D_MODEL)), nrm((1, D_MODEL)),                                   # Wq, bq
            nrm((D_MODEL, D_KV)),    nrm((1, D_KV)),                                      # Wk, bk
            nrm((D_MODEL, D_KV)),    nrm((1, D_KV)),                                      # Wv, bv
            nrm((D_MODEL, D_MODEL)), nrm((1, D_MODEL)),                                   # Wo, bo
            jnp.ones((1, D_MODEL), jnp.float32), jnp.zeros((1, D_MODEL), jnp.float32),    # ln2
            nrm((D_MODEL, FF_DIM)), nrm((D_MODEL, FF_DIM)), nrm((FF_DIM, D_MODEL)),       # gate/up/down (no bias)
        ))
    normf_w = jnp.ones((1, D_MODEL), jnp.float32)
    normf_b = jnp.zeros((1, D_MODEL), jnp.float32)
    return emb, layers, normf_w, normf_b


# ---------------- pure-JAX reference for sanity check ----------------
def ref_forward(enc_inputs, emb, layers, normf_w, normf_b):
    x = emb[enc_inputs]
    alibi = jnp.asarray(build_alibi_np(Q_HEADS, SEQ, ALIBI_MAX))

    def ln(x, w, b):
        mu = x.mean(-1, keepdims=True)
        var = ((x - mu) ** 2).mean(-1, keepdims=True)
        return (x - mu) / jnp.sqrt(var + EPS) * w[0] + b[0]

    hi = jax.lax.Precision.HIGHEST
    all_w = []
    for (ln1w, ln1b, wq, bq, wk, bk, wv, bv, wo, bo, ln2w, ln2b, wg, wu, wd) in layers:
        a = ln(x, ln1w, ln1b)
        q = jnp.matmul(a, wq, precision=hi) + bq[0]
        k = jnp.matmul(a, wk, precision=hi) + bk[0]
        v = jnp.matmul(a, wv, precision=hi) + bv[0]
        B, S, D = x.shape
        qh = q.reshape(B, S, Q_HEADS, HEAD_DIM).transpose(0, 2, 1, 3)
        kh = k.reshape(B, S, KV_HEADS, HEAD_DIM).transpose(0, 2, 1, 3)
        vh = v.reshape(B, S, KV_HEADS, HEAD_DIM).transpose(0, 2, 1, 3)
        kh = jnp.repeat(kh, N_REP, axis=1)
        vh = jnp.repeat(vh, N_REP, axis=1)
        scores = jnp.einsum('bhqd,bhkd->bhqk', qh, kh, precision=hi) * SCALE + alibi[None]
        p = jax.nn.softmax(scores, axis=-1)
        all_w.append(p)
        ctx = jnp.einsum('bhqk,bhkd->bhqd', p, vh, precision=hi)
        ctx = ctx.transpose(0, 2, 1, 3).reshape(B, S, D)
        x = x + jnp.matmul(ctx, wo, precision=hi) + bo[0]
        m = ln(x, ln2w, ln2b)
        g = jax.nn.silu(jnp.matmul(m, wg, precision=hi))
        x = x + jnp.matmul(g * jnp.matmul(m, wu, precision=hi), wd, precision=hi)
    return ln(x, normf_w, normf_b), all_w


if __name__ == "__main__":
    key = jax.random.PRNGKey(0)
    kp, kx = jax.random.split(key)
    emb, layers, normf_w, normf_b = init_params(kp)
    enc_inputs = jax.random.randint(kx, (BATCH, SEQ), 0, VOCAB, dtype=jnp.int32)

    stacked, bias = prepare_params(layers)            # once, outside the jitted per-call path

    fwd = jax.jit(transformer_encoder)
    out, all_w = fwd(enc_inputs, emb, stacked, bias, normf_w, normf_b)
    out = jax.block_until_ready(out)
    for w in all_w:
        jax.block_until_ready(w)

    ref_out, ref_w = ref_forward(enc_inputs, emb, layers, normf_w, normf_b)
    np.testing.assert_allclose(np.asarray(out), np.asarray(ref_out), rtol=1e-2, atol=1e-2)
    for w, rw in zip(all_w, ref_w):
        np.testing.assert_allclose(np.asarray(w), np.asarray(rw), rtol=1e-2, atol=1e-2)

    # TODO(synk): dropout paths are no-ops (rate=0.0 / eval mode), matching
    # nn.functional.dropout(training=False).
    print("KERNEL_OK")
</pallas_src>

<mosaic_0001>
module attributes {stable_mosaic.version = 11 : i64} {
  func.func @fused_encoder_kernel(%arg0: memref<16x32xf32, #tpu.memory_space<vmem>>, %arg1: memref<4x16x8xf32, #tpu.memory_space<vmem>>, %arg2: memref<2x1x32xf32, #tpu.memory_space<vmem>>, %arg3: memref<2x1x32xf32, #tpu.memory_space<vmem>>, %arg4: memref<2x32x32xf32, #tpu.memory_space<vmem>>, %arg5: memref<2x1x32xf32, #tpu.memory_space<vmem>>, %arg6: memref<2x32x16xf32, #tpu.memory_space<vmem>>, %arg7: memref<2x1x16xf32, #tpu.memory_space<vmem>>, %arg8: memref<2x32x16xf32, #tpu.memory_space<vmem>>, %arg9: memref<2x1x16xf32, #tpu.memory_space<vmem>>, %arg10: memref<2x4x8x32xf32, #tpu.memory_space<vmem>>, %arg11: memref<2x1x32xf32, #tpu.memory_space<vmem>>, %arg12: memref<2x1x32xf32, #tpu.memory_space<vmem>>, %arg13: memref<2x1x32xf32, #tpu.memory_space<vmem>>, %arg14: memref<2x32x64xf32, #tpu.memory_space<vmem>>, %arg15: memref<2x32x64xf32, #tpu.memory_space<vmem>>, %arg16: memref<2x64x32xf32, #tpu.memory_space<vmem>>, %arg17: memref<1x32xf32, #tpu.memory_space<vmem>>, %arg18: memref<1x32xf32, #tpu.memory_space<vmem>>, %arg19: memref<16x32xf32, #tpu.memory_space<vmem>>, %arg20: memref<2x4x16x8xf32, #tpu.memory_space<vmem>>) attributes {dimension_semantics = [], scalar_prefetch = 0 : i64, scratch_operands = 0 : i64, tpu.core_type = #tpu.core_type<tc>} {
    %c0 = arith.constant 0 : index
    %c0_0 = arith.constant 0 : index
    %0 = vector.load %arg0[%c0, %c0_0] : memref<16x32xf32, #tpu.memory_space<vmem>>, vector<16x32xf32>
    %c0_1 = arith.constant 0 : index
    %c0_2 = arith.constant 0 : index
    %c0_3 = arith.constant 0 : index
    %1 = vector.load %arg1[%c0_1, %c0_2, %c0_3] : memref<4x16x8xf32, #tpu.memory_space<vmem>>, vector<4x16x8xf32>
    %c0_4 = arith.constant 0 : index
    %c0_5 = arith.constant 0 : index
    %c0_6 = arith.constant 0 : index
    %2 = vector.load %arg2[%c0_4, %c0_5, %c0_6] : memref<2x1x32xf32, #tpu.memory_space<vmem>>, vector<1x1x32xf32>
    %3 = vector.shape_cast %2 : vector<1x1x32xf32> to vector<1x32xf32>
    %c0_7 = arith.constant 0 : index
    %c0_8 = arith.constant 0 : index
    %c0_9 = arith.constant 0 : index
    %4 = vector.load %arg3[%c0_7, %c0_8, %c0_9] : memref<2x1x32xf32, #tpu.memory_space<vmem>>, vector<1x1x32xf32>
    %5 = vector.shape_cast %4 : vector<1x1x32xf32> to vector<1x32xf32>
    %cst = arith.constant dense<0.000000e+00> : vector<16xf32>
    %6 = vector.multi_reduction <add>, %0, %cst [1] : vector<16x32xf32> to vector<16xf32>
    %7 = vector.shape_cast %6 : vector<16xf32> to vector<16x1xf32>
    %cst_10 = arith.constant 3.200000e+01 : f32
    %8 = vector.broadcast %cst_10 : f32 to vector<16x1xf32>
    %9 = arith.divf %7, %8 : vector<16x1xf32>
    %10 = vector.broadcast %9 : vector<16x1xf32> to vector<16x32xf32>
    %11 = arith.subf %0, %10 : vector<16x32xf32>
    %12 = arith.mulf %11, %11 : vector<16x32xf32>
    %cst_11 = arith.constant dense<0.000000e+00> : vector<16xf32>
    %13 = vector.multi_reduction <add>, %12, %cst_11 [1] : vector<16x32xf32> to vector<16xf32>
    %14 = vector.shape_cast %13 : vector<16xf32> to vector<16x1xf32>
    %cst_12 = arith.constant 3.200000e+01 : f32
    %15 = vector.broadcast %cst_12 : f32 to vector<16x1xf32>
    %16 = arith.divf %14, %15 : vector<16x1xf32>
    %17 = vector.broadcast %9 : vector<16x1xf32> to vector<16x32xf32>
    %18 = arith.subf %0, %17 : vector<16x32xf32>
    %cst_13 = arith.constant 9.99999974E-6 : f32
    %19 = vector.broadcast %cst_13 : f32 to vector<16x1xf32>
    %20 = arith.addf %16, %19 : vector<16x1xf32>
    %21 = math.rsqrt %20 : vector<16x1xf32>
    %22 = vector.broadcast %21 : vector<16x1xf32> to vector<16x32xf32>
    %23 = arith.mulf %18, %22 : vector<16x32xf32>
    %24 = vector.broadcast %3 : vector<1x32xf32> to vector<16x32xf32>
    %25 = arith.mulf %23, %24 : vector<16x32xf32>
    %26 = vector.broadcast %5 : vector<1x32xf32> to vector<16x32xf32>
    %27 = arith.addf %25, %26 : vector<16x32xf32>
    %c0_14 = arith.constant 0 : index
    %c0_15 = arith.constant 0 : index
    %c0_16 = arith.constant 0 : index
    %28 = vector.load %arg4[%c0_14, %c0_15, %c0_16] : memref<2x32x32xf32, #tpu.memory_space<vmem>>, vector<1x32x32xf32>
    %29 = vector.shape_cast %28 : vector<1x32x32xf32> to vector<32x32xf32>
    %cst_17 = arith.constant dense<0.000000e+00> : vector<16x32xf32>
    %30 = tpu.matmul %27, %29, %cst_17 {dimension_numbers = #tpu.dot_dimension_numbers<[1], [0], [0], [1], [0, 0, 1, 1], [], []>} : vector<16x32xf32>, vector<32x32xf32>, vector<16x32xf32> -> vector<16x32xf32>
    %c0_18 = arith.constant 0 : index
    %c0_19 = arith.constant 0 : index
    %c0_20 = arith.constant 0 : index
    %31 = vector.load %arg5[%c0_18, %c0_19, %c0_20] : memref<2x1x32xf32, #tpu.memory_space<vmem>>, vector<1x1x32xf32>
    %32 = vector.shape_cast %31 : vector<1x1x32xf32> to vector<1x32xf32>
    %33 = vector.broadcast %32 : vector<1x32xf32> to vector<16x32xf32>
    %34 = arith.addf %30, %33 : vector<16x32xf32>
    %c0_21 = arith.constant 0 : index
    %c0_22 = arith.constant 0 : index
    %c0_23 = arith.constant 0 : index
    %35 = vector.load %arg6[%c0_21, %c0_22, %c0_23] : memref<2x32x16xf32, #tpu.memory_space<vmem>>, vector<1x32x16xf32>
    %36 = vector.shape_cast %35 : vector<1x32x16xf32> to vector<32x16xf32>
    %cst_24 = arith.constant dense<0.000000e+00> : vector<16x16xf32>
    %37 = tpu.matmul %27, %36, %cst_24 {dimension_numbers = #tpu.dot_dimension_numbers<[1], [0], [0], [1], [0, 0, 1, 1], [], []>} : vector<16x32xf32>, vector<32x16xf32>, vector<16x16xf32> -> vector<16x16xf32>
    %c0_25 = arith.constant 0 : index
    %c0_26 = arith.constant 0 : index
    %c0_27 = arith.constant 0 : index
    %38 = vector.load %arg7[%c0_25, %c0_26, %c0_27] : memref<2x1x16xf32, #tpu.memory_space<vmem>>, vector<1x1x16xf32>
    %39 = vector.shape_cast %38 : vector<1x1x16xf32> to vector<1x16xf32>
    %40 = vector.broadcast %39 : vector<1x16xf32> to vector<16x16xf32>
    %41 = arith.addf %37, %40 : vector<16x16xf32>
    %c0_28 = arith.constant 0 : index
    %c0_29 = arith.constant 0 : index
    %c0_30 = arith.constant 0 : index
    %42 = vector.load %arg8[%c0_28, %c0_29, %c0_30] : memref<2x32x16xf32, #tpu.memory_space<vmem>>, vector<1x32x16xf32>
    %43 = vector.shape_cast %42 : vector<1x32x16xf32> to vector<32x16xf32>
    %cst_31 = arith.constant dense<0.000000e+00> : vector<16x16xf32>
    %44 = tpu.matmul %27, %43, %cst_31 {dimension_numbers = #tpu.dot_dimension_numbers<[1], [0], [0], [1], [0, 0, 1, 1], [], []>} : vector<16x32xf32>, vector<32x16xf32>, vector<16x16xf32> -> vector<16x16xf32>
    %c0_32 = arith.constant 0 : index
    %c0_33 = arith.constant 0 : index
    %c0_34 = arith.constant 0 : index
    %45 = vector.load %arg9[%c0_32, %c0_33, %c0_34] : memref<2x1x16xf32, #tpu.memory_space<vmem>>, vector<1x1x16xf32>
    %46 = vector.shape_cast %45 : vector<1x1x16xf32> to vector<1x16xf32>
    %47 = vector.broadcast %46 : vector<1x16xf32> to vector<16x16xf32>
    %48 = arith.addf %44, %47 : vector<16x16xf32>
    %49 = vector.extract_strided_slice %34 {offsets = [0, 0], sizes = [8, 8], strides = [1, 1]} : vector<16x32xf32> to vector<8x8xf32>
    %50 = vector.extract_strided_slice %34 {offsets = [0, 8], sizes = [8, 8], strides = [1, 1]} : vector<16x32xf32> to vector<8x8xf32>
    %51 = tpu.concatenate %49, %50 in 0 : vector<8x8xf32>, vector<8x8xf32> -> vector<16x8xf32>
    %52 = vector.extract_strided_slice %34 {offsets = [0, 16], sizes = [8, 8], strides = [1, 1]} : vector<16x32xf32> to vector<8x8xf32>
    %53 = vector.extract_strided_slice %34 {offsets = [0, 24], sizes = [8, 8], strides = [1, 1]} : vector<16x32xf32> to vector<8x8xf32>
    %54 = tpu.concatenate %52, %53 in 0 : vector<8x8xf32>, vector<8x8xf32> -> vector<16x8xf32>
    %55 = vector.extract_strided_slice %34 {offsets = [8, 0], sizes = [8, 8], strides = [1, 1]} : vector<16x32xf32> to vector<8x8xf32>
    %56 = vector.extract_strided_slice %34 {offsets = [8, 8], sizes = [8, 8], strides = [1, 1]} : vector<16x32xf32> to vector<8x8xf32>
    %57 = tpu.concatenate %55, %56 in 0 : vector<8x8xf32>, vector<8x8xf32> -> vector<16x8xf32>
    %58 = vector.extract_strided_slice %34 {offsets = [8, 16], sizes = [8, 8], strides = [1, 1]} : vector<16x32xf32> to vector<8x8xf32>
    %59 = vector.extract_strided_slice %34 {offsets = [8, 24], sizes = [8, 8], strides = [1, 1]} : vector<16x32xf32> to vector<8x8xf32>
    %60 = tpu.concatenate %58, %59 in 0 : vector<8x8xf32>, vector<8x8xf32> -> vector<16x8xf32>
    %61 = vector.shape_cast %51 : vector<16x8xf32> to vector<1x16x8xf32>
    %62 = vector.shape_cast %54 : vector<16x8xf32> to vector<1x16x8xf32>
    %63 = vector.shape_cast %57 : vector<16x8xf32> to vector<1x16x8xf32>
    %64 = vector.shape_cast %60 : vector<16x8xf32> to vector<1x16x8xf32>
    %65 = tpu.concatenate %61, %62, %63, %64 in 0 : vector<1x16x8xf32>, vector<1x16x8xf32>, vector<1x16x8xf32>, vector<1x16x8xf32> -> vector<4x16x8xf32>
    %66 = vector.extract_strided_slice %41 {offsets = [0, 0], sizes = [8, 8], strides = [1, 1]} : vector<16x16xf32> to vector<8x8xf32>
    %67 = vector.extract_strided_slice %41 {offsets = [0, 8], sizes = [8, 8], strides = [1, 1]} : vector<16x16xf32> to vector<8x8xf32>
    %68 = vector.extract_strided_slice %41 {offsets = [8, 0], sizes = [8, 8], strides = [1, 1]} : vector<16x16xf32> to vector<8x8xf32>
    %69 = vector.extract_strided_slice %41 {offsets = [8, 8], sizes = [8, 8], strides = [1, 1]} : vector<16x16xf32> to vector<8x8xf32>
    %70 = vector.shape_cast %66 : vector<8x8xf32> to vector<1x8x8xf32>
    %71 = vector.shape_cast %67 : vector<8x8xf32> to vector<1x8x8xf32>
    %72 = vector.shape_cast %68 : vector<8x8xf32> to vector<1x8x8xf32>
    %73 = vector.shape_cast %69 : vector<8x8xf32> to vector<1x8x8xf32>
    %74 = tpu.concatenate %70, %71, %72, %73 in 0 : vector<1x8x8xf32>, vector<1x8x8xf32>, vector<1x8x8xf32>, vector<1x8x8xf32> -> vector<4x8x8xf32>
    %75 = vector.extract_strided_slice %48 {offsets = [0, 0], sizes = [8, 8], strides = [1, 1]} : vector<16x16xf32> to vector<8x8xf32>
    %76 = vector.extract_strided_slice %48 {offsets = [0, 8], sizes = [8, 8], strides = [1, 1]} : vector<16x16xf32> to vector<8x8xf32>
    %77 = vector.extract_strided_slice %48 {offsets = [8, 0], sizes = [8, 8], strides = [1, 1]} : vector<16x16xf32> to vector<8x8xf32>
    %78 = vector.extract_strided_slice %48 {offsets = [8, 8], sizes = [8, 8], strides = [1, 1]} : vector<16x16xf32> to vector<8x8xf32>
    %79 = vector.shape_cast %75 : vector<8x8xf32> to vector<1x8x8xf32>
    %80 = vector.shape_cast %76 : vector<8x8xf32> to vector<1x8x8xf32>
    %81 = vector.shape_cast %77 : vector<8x8xf32> to vector<1x8x8xf32>
    %82 = vector.shape_cast %78 : vector<8x8xf32> to vector<1x8x8xf32>
    %83 = tpu.concatenate %79, %80, %81, %82 in 0 : vector<1x8x8xf32>, vector<1x8x8xf32>, vector<1x8x8xf32>, vector<1x8x8xf32> -> vector<4x8x8xf32>
    "tpu.trace_start"() <{level = 10 : i32, message = "nqd,nkd->nqk"}> : () -> ()
    %cst_35 = arith.constant dense<0.000000e+00> : vector<4x16x8xf32>
    %84 = tpu.matmul %65, %74, %cst_35 {dimension_numbers = #tpu.dot_dimension_numbers<[2], [2], [1], [1], [0, 0, 0, 1, 1, 1], [0], [0]>} : vector<4x16x8xf32>, vector<4x8x8xf32>, vector<4x16x8xf32> -> vector<4x16x8xf32>
    "tpu.trace_stop"() : () -> ()
    %cst_36 = arith.constant 0.353553385 : f32
    %85 = vector.broadcast %cst_36 : f32 to vector<4x16x8xf32>
    %86 = arith.mulf %84, %85 : vector<4x16x8xf32>
    %87 = arith.addf %86, %1 : vector<4x16x8xf32>
    %cst_37 = arith.constant dense<0xFF800000> : vector<4x16xf32>
    %88 = vector.multi_reduction <maximumf>, %87, %cst_37 [2] : vector<4x16x8xf32> to vector<4x16xf32>
    %89 = vector.shape_cast %88 : vector<4x16xf32> to vector<4x16x1xf32>
    %90 = vector.broadcast %89 : vector<4x16x1xf32> to vector<4x16x8xf32>
    %91 = arith.subf %87, %90 : vector<4x16x8xf32>
    %92 = math.exp %91 : vector<4x16x8xf32>
    %cst_38 = arith.constant dense<0.000000e+00> : vector<4x16xf32>
    %93 = vector.multi_reduction <add>, %92, %cst_38 [2] : vector<4x16x8xf32> to vector<4x16xf32>
    %94 = vector.shape_cast %93 : vector<4x16xf32> to vector<4x16x1xf32>
    %95 = tpu.reciprocal %94 {approx = true} : vector<4x16x1xf32> -> vector<4x16x1xf32>
    %96 = vector.broadcast %95 : vector<4x16x1xf32> to vector<4x16x8xf32>
    %97 = arith.mulf %92, %96 : vector<4x16x8xf32>
    %c0_39 = arith.constant 0 : index
    %c0_40 = arith.constant 0 : index
    %c0_41 = arith.constant 0 : index
    %c0_42 = arith.constant 0 : index
    %98 = vector.load %arg20[%c0_39, %c0_40, %c0_41, %c0_42] : memref<2x4x16x8xf32, #tpu.memory_space<vmem>>, vector<1x4x16x8xf32>
    %99 = vector.shape_cast %98 : vector<1x4x16x8xf32> to vector<4x16x8xf32>
    %100 = vector.shape_cast %97 : vector<4x16x8xf32> to vector<1x4x16x8xf32>
    tpu.vector_store %arg20[%c0_39, %c0_40, %c0_41, %c0_42], %100 {strides = array<i32>} : memref<2x4x16x8xf32, #tpu.memory_space<vmem>>, vector<1x4x16x8xf32>,
    "tpu.trace_start"() <{level = 10 : i32, message = "nqk,nkd->nqd"}> : () -> ()
    %cst_43 = arith.constant dense<0.000000e+00> : vector<4x16x8xf32>
    %101 = tpu.matmul %97, %83, %cst_43 {dimension_numbers = #tpu.dot_dimension_numbers<[2], [1], [1], [2], [0, 0, 0, 1, 1, 2], [0], [0]>} : vector<4x16x8xf32>, vector<4x8x8xf32>, vector<4x16x8xf32> -> vector<4x16x8xf32>
    "tpu.trace_stop"() : () -> ()
    %c0_44 = arith.constant 0 : index
    %c0_45 = arith.constant 0 : index
    %c0_46 = arith.constant 0 : index
    %102 = vector.load %arg11[%c0_44, %c0_45, %c0_46] : memref<2x1x32xf32, #tpu.memory_space<vmem>>, vector<1x1x32xf32>
    %103 = vector.shape_cast %102 : vector<1x1x32xf32> to vector<1x32xf32>
    %104 = vector.extract_strided_slice %101 {offsets = [0, 0, 0], sizes = [1, 8, 8], strides = [1, 1, 1]} : vector<4x16x8xf32> to vector<1x8x8xf32>
    %105 = vector.shape_cast %104 : vector<1x8x8xf32> to vector<8x8xf32>
    %106 = vector.extract_strided_slice %101 {offsets = [2, 0, 0], sizes = [1, 8, 8], strides = [1, 1, 1]} : vector<4x16x8xf32> to vector<1x8x8xf32>
    %107 = vector.shape_cast %106 : vector<1x8x8xf32> to vector<8x8xf32>
    %108 = tpu.concatenate %105, %107 in 0 : vector<8x8xf32>, vector<8x8xf32> -> vector<16x8xf32>
    %c0_47 = arith.constant 0 : index
    %c0_48 = arith.constant 0 : index
    %c0_49 = arith.constant 0 : index
    %c0_50 = arith.constant 0 : index
    %109 = vector.load %arg10[%c0_47, %c0_48, %c0_49, %c0_50] : memref<2x4x8x32xf32, #tpu.memory_space<vmem>>, vector<1x1x8x32xf32>
    %110 = vector.shape_cast %109 : vector<1x1x8x32xf32> to vector<8x32xf32>
    %cst_51 = arith.constant dense<0.000000e+00> : vector<16x32xf32>
    %111 = tpu.matmul %108, %110, %cst_51 {dimension_numbers = #tpu.dot_dimension_numbers<[1], [0], [0], [1], [0, 0, 1, 1], [], []>} : vector<16x8xf32>, vector<8x32xf32>, vector<16x32xf32> -> vector<16x32xf32>
    %112 = vector.broadcast %103 : vector<1x32xf32> to vector<16x32xf32>
    %113 = arith.addf %112, %111 : vector<16x32xf32>
    %114 = vector.extract_strided_slice %101 {offsets = [0, 8, 0], sizes = [1, 8, 8], strides = [1, 1, 1]} : vector<4x16x8xf32> to vector<1x8x8xf32>
    %115 = vector.shape_cast %114 : vector<1x8x8xf32> to vector<8x8xf32>
    %116 = vector.extract_strided_slice %101 {offsets = [2, 8, 0], sizes = [1, 8, 8], strides = [1, 1, 1]} : vector<4x16x8xf32> to vector<1x8x8xf32>
    %117 = vector.shape_cast %116 : vector<1x8x8xf32> to vector<8x8xf32>
    %118 = tpu.concatenate %115, %117 in 0 : vector<8x8xf32>, vector<8x8xf32> -> vector<16x8xf32>
    %c0_52 = arith.constant 0 : index
    %c1 = arith.constant 1 : index
    %c0_53 = arith.constant 0 : index
    %c0_54 = arith.constant 0 : index
    %119 = vector.load %arg10[%c0_52, %c1, %c0_53, %c0_54] : memref<2x4x8x32xf32, #tpu.memory_space<vmem>>, vector<1x1x8x32xf32>
    %120 = vector.shape_cast %119 : vector<1x1x8x32xf32> to vector<8x32xf32>
    %cst_55 = arith.constant dense<0.000000e+00> : vector<16x32xf32>
    %121 = tpu.matmul %118, %120, %cst_55 {dimension_numbers = #tpu.dot_dimension_numbers<[1], [0], [0], [1], [0, 0, 1, 1], [], []>} : vector<16x8xf32>, vector<8x32xf32>, vector<16x32xf32> -> vector<16x32xf32>
    %122 = arith.addf %113, %121 : vector<16x32xf32>
    %123 = vector.extract_strided_slice %101 {offsets = [1, 0, 0], sizes = [1, 8, 8], strides = [1, 1, 1]} : vector<4x16x8xf32> to vector<1x8x8xf32>
    %124 = vector.shape_cast %123 : vector<1x8x8xf32> to vector<8x8xf32>
    %125 = vector.extract_strided_slice %101 {offsets = [3, 0, 0], sizes = [1, 8, 8], strides = [1, 1, 1]} : vector<4x16x8xf32> to vector<1x8x8xf32>
    %126 = vector.shape_cast %125 : vector<1x8x8xf32> to vector<8x8xf32>
    %127 = tpu.concatenate %124, %126 in 0 : vector<8x8xf32>, vector<8x8xf32> -> vector<16x8xf32>
    %c0_56 = arith.constant 0 : index
    %c2 = arith.constant 2 : index
    %c0_57 = arith.constant 0 : index
    %c0_58 = arith.constant 0 : index
    %128 = vector.load %arg10[%c0_56, %c2, %c0_57, %c0_58] : memref<2x4x8x32xf32, #tpu.memory_space<vmem>>, vector<1x1x8x32xf32>
    %129 = vector.shape_cast %128 : vector<1x1x8x32xf32> to vector<8x32xf32>
    %cst_59 = arith.constant dense<0.000000e+00> : vector<16x32xf32>
    %130 = tpu.matmul %127, %129, %cst_59 {dimension_numbers = #tpu.dot_dimension_numbers<[1], [0], [0], [1], [0, 0, 1, 1], [], []>} : vector<16x8xf32>, vector<8x32xf32>, vector<16x32xf32> -> vector<16x32xf32>
    %131 = arith.addf %122, %130 : vector<16x32xf32>
    %132 = vector.extract_strided_slice %101 {offsets = [1, 8, 0], sizes = [1, 8, 8], strides = [1, 1, 1]} : vector<4x16x8xf32> to vector<1x8x8xf32>
    %133 = vector.shape_cast %132 : vector<1x8x8xf32> to vector<8x8xf32>
    %134 = vector.extract_strided_slice %101 {offsets = [3, 8, 0], sizes = [1, 8, 8], strides = [1, 1, 1]} : vector<4x16x8xf32> to vector<1x8x8xf32>
    %135 = vector.shape_cast %134 : vector<1x8x8xf32> to vector<8x8xf32>
    %136 = tpu.concatenate %133, %135 in 0 : vector<8x8xf32>, vector<8x8xf32> -> vector<16x8xf32>
    %c0_60 = arith.constant 0 : index
    %c3 = arith.constant 3 : index
    %c0_61 = arith.constant 0 : index
    %c0_62 = arith.constant 0 : index
    %137 = vector.load %arg10[%c0_60, %c3, %c0_61, %c0_62] : memref<2x4x8x32xf32, #tpu.memory_space<vmem>>, vector<1x1x8x32xf32>
    %138 = vector.shape_cast %137 : vector<1x1x8x32xf32> to vector<8x32xf32>
    %cst_63 = arith.constant dense<0.000000e+00> : vector<16x32xf32>
    %139 = tpu.matmul %136, %138, %cst_63 {dimension_numbers = #tpu.dot_dimension_numbers<[1], [0], [0], [1], [0, 0, 1, 1], [], []>} : vector<16x8xf32>, vector<8x32xf32>, vector<16x32xf32> -> vector<16x32xf32>
    %140 = arith.addf %131, %139 : vector<16x32xf32>
    %141 = arith.addf %0, %140 : vector<16x32xf32>
    %c0_64 = arith.constant 0 : index
    %c0_65 = arith.constant 0 : index
    %c0_66 = arith.constant 0 : index
    %142 = vector.load %arg12[%c0_64, %c0_65, %c0_66] : memref<2x1x32xf32, #tpu.memory_space<vmem>>, vector<1x1x32xf32>
    %143 = vector.shape_cast %142 : vector<1x1x32xf32> to vector<1x32xf32>
    %c0_67 = arith.constant 0 : index
    %c0_68 = arith.constant 0 : index
    %c0_69 = arith.constant 0 : index
    %144 = vector.load %arg13[%c0_67, %c0_68, %c0_69] : memref<2x1x32xf32, #tpu.memory_space<vmem>>, vector<1x1x32xf32>
    %145 = vector.shape_cast %144 : vector<1x1x32xf32> to vector<1x32xf32>
    %cst_70 = arith.constant dense<0.000000e+00> : vector<16xf32>
    %146 = vector.multi_reduction <add>, %141, %cst_70 [1] : vector<16x32xf32> to vector<16xf32>
    %147 = vector.shape_cast %146 : vector<16xf32> to vector<16x1xf32>
    %cst_71 = arith.constant 3.200000e+01 : f32
    %148 = vector.broadcast %cst_71 : f32 to vector<16x1xf32>
    %149 = arith.divf %147, %148 : vector<16x1xf32>
    %150 = vector.broadcast %149 : vector<16x1xf32> to vector<16x32xf32>
    %151 = arith.subf %141, %150 : vector<16x32xf32>
    %152 = arith.mulf %151, %151 : vector<16x32xf32>
    %cst_72 = arith.constant dense<0.000000e+00> : vector<16xf32>
    %153 = vector.multi_reduction <add>, %152, %cst_72 [1] : vector<16x32xf32> to vector<16xf32>
    %154 = vector.shape_cast %153 : vector<16xf32> to vector<16x1xf32>
    %cst_73 = arith.constant 3.200000e+01 : f32
    %155 = vector.broadcast %cst_73 : f32 to vector<16x1xf32>
    %156 = arith.divf %154, %155 : vector<16x1xf32>
    %157 = vector.broadcast %149 : vector<16x1xf32> to vector<16x32xf32>
    %158 = arith.subf %141, %157 : vector<16x32xf32>
    %cst_74 = arith.constant 9.99999974E-6 : f32
    %159 = vector.broadcast %cst_74 : f32 to vector<16x1xf32>
    %160 = arith.addf %156, %159 : vector<16x1xf32>
    %161 = math.rsqrt %160 : vector<16x1xf32>
    %162 = vector.broadcast %161 : vector<16x1xf32> to vector<16x32xf32>
    %163 = arith.mulf %158, %162 : vector<16x32xf32>
    %164 = vector.broadcast %143 : vector<1x32xf32> to vector<16x32xf32>
    %165 = arith.mulf %163, %164 : vector<16x32xf32>
    %166 = vector.broadcast %145 : vector<1x32xf32> to vector<16x32xf32>
    %167 = arith.addf %165, %166 : vector<16x32xf32>
    %c0_75 = arith.constant 0 : index
    %c0_76 = arith.constant 0 : index
    %c0_77 = arith.constant 0 : index
    %168 = vector.load %arg14[%c0_75, %c0_76, %c0_77] : memref<2x32x64xf32, #tpu.memory_space<vmem>>, vector<1x32x64xf32>
    %169 = vector.shape_cast %168 : vector<1x32x64xf32> to vector<32x64xf32>
    %cst_78 = arith.constant dense<0.000000e+00> : vector<16x64xf32>
    %170 = tpu.matmul %167, %169, %cst_78 {dimension_numbers = #tpu.dot_dimension_numbers<[1], [0], [0], [1], [0, 0, 1, 1], [], []>} : vector<16x32xf32>, vector<32x64xf32>, vector<16x64xf32> -> vector<16x64xf32>
    %171 = arith.negf %170 : vector<16x64xf32>
    %172 = math.exp %171 : vector<16x64xf32>
    %cst_79 = arith.constant 1.000000e+00 : f32
    %173 = vector.broadcast %cst_79 : f32 to vector<16x64xf32>
    %174 = arith.addf %173, %172 : vector<16x64xf32>
    %175 = arith.divf %173, %174 : vector<16x64xf32>
    %176 = arith.mulf %170, %175 : vector<16x64xf32>
    %c0_80 = arith.constant 0 : index
    %c0_81 = arith.constant 0 : index
    %c0_82 = arith.constant 0 : index
    %177 = vector.load %arg15[%c0_80, %c0_81, %c0_82] : memref<2x32x64xf32, #tpu.memory_space<vmem>>, vector<1x32x64xf32>
    %178 = vector.shape_cast %177 : vector<1x32x64xf32> to vector<32x64xf32>
    %cst_83 = arith.constant dense<0.000000e+00> : vector<16x64xf32>
    %179 = tpu.matmul %167, %178, %cst_83 {dimension_numbers = #tpu.dot_dimension_numbers<[1], [0], [0], [1], [0, 0, 1, 1], [], []>} : vector<16x32xf32>, vector<32x64xf32>, vector<16x64xf32> -> vector<16x64xf32>
    %180 = arith.mulf %176, %179 : vector<16x64xf32>
    %c0_84 = arith.constant 0 : index
    %c0_85 = arith.constant 0 : index
    %c0_86 = arith.constant 0 : index
    %181 = vector.load %arg16[%c0_84, %c0_85, %c0_86] : memref<2x64x32xf32, #tpu.memory_space<vmem>>, vector<1x64x32xf32>
    %182 = vector.shape_cast %181 : vector<1x64x32xf32> to vector<64x32xf32>
    %cst_87 = arith.constant dense<0.000000e+00> : vector<16x32xf32>
    %183 = tpu.matmul %180, %182, %cst_87 {dimension_numbers = #tpu.dot_dimension_numbers<[1], [0], [0], [1], [0, 0, 1, 1], [], []>} : vector<16x64xf32>, vector<64x32xf32>, vector<16x32xf32> -> vector<16x32xf32>
    %184 = arith.addf %141, %183 : vector<16x32xf32>
    %c1_88 = arith.constant 1 : index
    %c0_89 = arith.constant 0 : index
    %c0_90 = arith.constant 0 : index
    %185 = vector.load %arg2[%c1_88, %c0_89, %c0_90] : memref<2x1x32xf32, #tpu.memory_space<vmem>>, vector<1x1x32xf32>
    %186 = vector.shape_cast %185 : vector<1x1x32xf32> to vector<1x32xf32>
    %c1_91 = arith.constant 1 : index
    %c0_92 = arith.constant 0 : index
    %c0_93 = arith.constant 0 : index
    %187 = vector.load %arg3[%c1_91, %c0_92, %c0_93] : memref<2x1x32xf32, #tpu.memory_space<vmem>>, vector<1x1x32xf32>
    %188 = vector.shape_cast %187 : vector<1x1x32xf32> to vector<1x32xf32>
    %cst_94 = arith.constant dense<0.000000e+00> : vector<16xf32>
    %189 = vector.multi_reduction <add>, %184, %cst_94 [1] : vector<16x32xf32> to vector<16xf32>
    %190 = vector.shape_cast %189 : vector<16xf32> to vector<16x1xf32>
    %cst_95 = arith.constant 3.200000e+01 : f32
    %191 = vector.broadcast %cst_95 : f32 to vector<16x1xf32>
    %192 = arith.divf %190, %191 : vector<16x1xf32>
    %193 = vector.broadcast %192 : vector<16x1xf32> to vector<16x32xf32>
    %194 = arith.subf %184, %193 : vector<16x32xf32>
    %195 = arith.mulf %194, %194 : vector<16x32xf32>
    %cst_96 = arith.constant dense<0.000000e+00> : vector<16xf32>
    %196 = vector.multi_reduction <add>, %195, %cst_96 [1] : vector<16x32xf32> to vector<16xf32>
    %197 = vector.shape_cast %196 : vector<16xf32> to vector<16x1xf32>
    %cst_97 = arith.constant 3.200000e+01 : f32
    %198 = vector.broadcast %cst_97 : f32 to vector<16x1xf32>
    %199 = arith.divf %197, %198 : vector<16x1xf32>
    %200 = vector.broadcast %192 : vector<16x1xf32> to vector<16x32xf32>
    %201 = arith.subf %184, %200 : vector<16x32xf32>
    %cst_98 = arith.constant 9.99999974E-6 : f32
    %202 = vector.broadcast %cst_98 : f32 to vector<16x1xf32>
    %203 = arith.addf %199, %202 : vector<16x1xf32>
    %204 = math.rsqrt %203 : vector<16x1xf32>
    %205 = vector.broadcast %204 : vector<16x1xf32> to vector<16x32xf32>
    %206 = arith.mulf %201, %205 : vector<16x32xf32>
    %207 = vector.broadcast %186 : vector<1x32xf32> to vector<16x32xf32>
    %208 = arith.mulf %206, %207 : vector<16x32xf32>
    %209 = vector.broadcast %188 : vector<1x32xf32> to vector<16x32xf32>
    %210 = arith.addf %208, %209 : vector<16x32xf32>
    %c1_99 = arith.constant 1 : index
    %c0_100 = arith.constant 0 : index
    %c0_101 = arith.constant 0 : index
    %211 = vector.load %arg4[%c1_99, %c0_100, %c0_101] : memref<2x32x32xf32, #tpu.memory_space<vmem>>, vector<1x32x32xf32>
    %212 = vector.shape_cast %211 : vector<1x32x32xf32> to vector<32x32xf32>
    %cst_102 = arith.constant dense<0.000000e+00> : vector<16x32xf32>
    %213 = tpu.matmul %210, %212, %cst_102 {dimension_numbers = #tpu.dot_dimension_numbers<[1], [0], [0], [1], [0, 0, 1, 1], [], []>} : vector<16x32xf32>, vector<32x32xf32>, vector<16x32xf32> -> vector<16x32xf32>
    %c1_103 = arith.constant 1 : index
    %c0_104 = arith.constant 0 : index
    %c0_105 = arith.constant 0 : index
    %214 = vector.load %arg5[%c1_103, %c0_104, %c0_105] : memref<2x1x32xf32, #tpu.memory_space<vmem>>, vector<1x1x32xf32>
    %215 = vector.shape_cast %214 : vector<1x1x32xf32> to vector<1x32xf32>
    %216 = vector.broadcast %215 : vector<1x32xf32> to vector<16x32xf32>
    %217 = arith.addf %213, %216 : vector<16x32xf32>
    %c1_106 = arith.constant 1 : index
    %c0_107 = arith.constant 0 : index
    %c0_108 = arith.constant 0 : index
    %218 = vector.load %arg6[%c1_106, %c0_107, %c0_108] : memref<2x32x16xf32, #tpu.memory_space<vmem>>, vector<1x32x16xf32>
    %219 = vector.shape_cast %218 : vector<1x32x16xf32> to vector<32x16xf32>
    %cst_109 = arith.constant dense<0.000000e+00> : vector<16x16xf32>
    %220 = tpu.matmul %210, %219, %cst_109 {dimension_numbers = #tpu.dot_dimension_numbers<[1], [0], [0], [1], [0, 0, 1, 1], [], []>} : vector<16x32xf32>, vector<32x16xf32>, vector<16x16xf32> -> vector<16x16xf32>
    %c1_110 = arith.constant 1 : index
    %c0_111 = arith.constant 0 : index
    %c0_112 = arith.constant 0 : index
    %221 = vector.load %arg7[%c1_110, %c0_111, %c0_112] : memref<2x1x16xf32, #tpu.memory_space<vmem>>, vector<1x1x16xf32>
    %222 = vector.shape_cast %221 : vector<1x1x16xf32> to vector<1x16xf32>
    %223 = vector.broadcast %222 : vector<1x16xf32> to vector<16x16xf32>
    %224 = arith.addf %220, %223 : vector<16x16xf32>
    %c1_113 = arith.constant 1 : index
    %c0_114 = arith.constant 0 : index
    %c0_115 = arith.constant 0 : index
    %225 = vector.load %arg8[%c1_113, %c0_114, %c0_115] : memref<2x32x16xf32, #tpu.memory_space<vmem>>, vector<1x32x16xf32>
    %226 = vector.shape_cast %225 : vector<1x32x16xf32> to vector<32x16xf32>
    %cst_116 = arith.constant dense<0.000000e+00> : vector<16x16xf32>
    %227 = tpu.matmul %210, %226, %cst_116 {dimension_numbers = #tpu.dot_dimension_numbers<[1], [0], [0], [1], [0, 0, 1, 1], [], []>} : vector<16x32xf32>, vector<32x16xf32>, vector<16x16xf32> -> vector<16x16xf32>
    %c1_117 = arith.constant 1 : index
    %c0_118 = arith.constant 0 : index
    %c0_119 = arith.constant 0 : index
    %228 = vector.load %arg9[%c1_117, %c0_118, %c0_119] : memref<2x1x16xf32, #tpu.memory_space<vmem>>, vector<1x1x16xf32>
    %229 = vector.shape_cast %228 : vector<1x1x16xf32> to vector<1x16xf32>
    %230 = vector.broadcast %229 : vector<1x16xf32> to vector<16x16xf32>
    %231 = arith.addf %227, %230 : vector<16x16xf32>
    %232 = vector.extract_strided_slice %217 {offsets = [0, 0], sizes = [8, 8], strides = [1, 1]} : vector<16x32xf32> to vector<8x8xf32>
    %233 = vector.extract_strided_slice %217 {offsets = [0, 8], sizes = [8, 8], strides = [1, 1]} : vector<16x32xf32> to vector<8x8xf32>
    %234 = tpu.concatenate %232, %233 in 0 : vector<8x8xf32>, vector<8x8xf32> -> vector<16x8xf32>
    %235 = vector.extract_strided_slice %217 {offsets = [0, 16], sizes = [8, 8], strides = [1, 1]} : vector<16x32xf32> to vector<8x8xf32>
    %236 = vector.extract_strided_slice %217 {offsets = [0, 24], sizes = [8, 8], strides = [1, 1]} : vector<16x32xf32> to vector<8x8xf32>
    %237 = tpu.concatenate %235, %236 in 0 : vector<8x8xf32>, vector<8x8xf32> -> vector<16x8xf32>
    %238 = vector.extract_strided_slice %217 {offsets = [8, 0], sizes = [8, 8], strides = [1, 1]} : vector<16x32xf32> to vector<8x8xf32>
    %239 = vector.extract_strided_slice %217 {offsets = [8, 8], sizes = [8, 8], strides = [1, 1]} : vector<16x32xf32> to vector<8x8xf32>
    %240 = tpu.concatenate %238, %239 in 0 : vector<8x8xf32>, vector<8x8xf32> -> vector<16x8xf32>
    %241 = vector.extract_strided_slice %217 {offsets = [8, 16], sizes = [8, 8], strides = [1, 1]} : vector<16x32xf32> to vector<8x8xf32>
    %242 = vector.extract_strided_slice %217 {offsets = [8, 24], sizes = [8, 8], strides = [1, 1]} : vector<16x32xf32> to vector<8x8xf32>
    %243 = tpu.concatenate %241, %242 in 0 : vector<8x8xf32>, vector<8x8xf32> -> vector<16x8xf32>
    %244 = vector.shape_cast %234 : vector<16x8xf32> to vector<1x16x8xf32>
    %245 = vector.shape_cast %237 : vector<16x8xf32> to vector<1x16x8xf32>
    %246 = vector.shape_cast %240 : vector<16x8xf32> to vector<1x16x8xf32>
    %247 = vector.shape_cast %243 : vector<16x8xf32> to vector<1x16x8xf32>
    %248 = tpu.concatenate %244, %245, %246, %247 in 0 : vector<1x16x8xf32>, vector<1x16x8xf32>, vector<1x16x8xf32>, vector<1x16x8xf32> -> vector<4x16x8xf32>
    %249 = vector.extract_strided_slice %224 {offsets = [0, 0], sizes = [8, 8], strides = [1, 1]} : vector<16x16xf32> to vector<8x8xf32>
    %250 = vector.extract_strided_slice %224 {offsets = [0, 8], sizes = [8, 8], strides = [1, 1]} : vector<16x16xf32> to vector<8x8xf32>
    %251 = vector.extract_strided_slice %224 {offsets = [8, 0], sizes = [8, 8], strides = [1, 1]} : vector<16x16xf32> to vector<8x8xf32>
    %252 = vector.extract_strided_slice %224 {offsets = [8, 8], sizes = [8, 8], strides = [1, 1]} : vector<16x16xf32> to vector<8x8xf32>
    %253 = vector.shape_cast %249 : vector<8x8xf32> to vector<1x8x8xf32>
    %254 = vector.shape_cast %250 : vector<8x8xf32> to vector<1x8x8xf32>
    %255 = vector.shape_cast %251 : vector<8x8xf32> to vector<1x8x8xf32>
    %256 = vector.shape_cast %252 : vector<8x8xf32> to vector<1x8x8xf32>
    %257 = tpu.concatenate %253, %254, %255, %256 in 0 : vector<1x8x8xf32>, vector<1x8x8xf32>, vector<1x8x8xf32>, vector<1x8x8xf32> -> vector<4x8x8xf32>
    %258 = vector.extract_strided_slice %231 {offsets = [0, 0], sizes = [8, 8], strides = [1, 1]} : vector<16x16xf32> to vector<8x8xf32>
    %259 = vector.extract_strided_slice %231 {offsets = [0, 8], sizes = [8, 8], strides = [1, 1]} : vector<16x16xf32> to vector<8x8xf32>
    %260 = vector.extract_strided_slice %231 {offsets = [8, 0], sizes = [8, 8], strides = [1, 1]} : vector<16x16xf32> to vector<8x8xf32>
    %261 = vector.extract_strided_slice %231 {offsets = [8, 8], sizes = [8, 8], strides = [1, 1]} : vector<16x16xf32> to vector<8x8xf32>
    %262 = vector.shape_cast %258 : vector<8x8xf32> to vector<1x8x8xf32>
    %263 = vector.shape_cast %259 : vector<8x8xf32> to vector<1x8x8xf32>
    %264 = vector.shape_cast %260 : vector<8x8xf32> to vector<1x8x8xf32>
    %265 = vector.shape_cast %261 : vector<8x8xf32> to vector<1x8x8xf32>
    %266 = tpu.concatenate %262, %263, %264, %265 in 0 : vector<1x8x8xf32>, vector<1x8x8xf32>, vector<1x8x8xf32>, vector<1x8x8xf32> -> vector<4x8x8xf32>
    "tpu.trace_start"() <{level = 10 : i32, message = "nqd,nkd->nqk"}> : () -> ()
    %cst_120 = arith.constant dense<0.000000e+00> : vector<4x16x8xf32>
    %267 = tpu.matmul %248, %257, %cst_120 {dimension_numbers = #tpu.dot_dimension_numbers<[2], [2], [1], [1], [0, 0, 0, 1, 1, 1], [0], [0]>} : vector<4x16x8xf32>, vector<4x8x8xf32>, vector<4x16x8xf32> -> vector<4x16x8xf32>
    "tpu.trace_stop"() : () -> ()
    %cst_121 = arith.constant 0.353553385 : f32
    %268 = vector.broadcast %cst_121 : f32 to vector<4x16x8xf32>
    %269 = arith.mulf %267, %268 : vector<4x16x8xf32>
    %270 = arith.addf %269, %1 : vector<4x16x8xf32>
    %cst_122 = arith.constant dense<0xFF800000> : vector<4x16xf32>
    %271 = vector.multi_reduction <maximumf>, %270, %cst_122 [2] : vector<4x16x8xf32> to vector<4x16xf32>
    %272 = vector.shape_cast %271 : vector<4x16xf32> to vector<4x16x1xf32>
    %273 = vector.broadcast %272 : vector<4x16x1xf32> to vector<4x16x8xf32>
    %274 = arith.subf %270, %273 : vector<4x16x8xf32>
    %275 = math.exp %274 : vector<4x16x8xf32>
    %cst_123 = arith.constant dense<0.000000e+00> : vector<4x16xf32>
    %276 = vector.multi_reduction <add>, %275, %cst_123 [2] : vector<4x16x8xf32> to vector<4x16xf32>
    %277 = vector.shape_cast %276 : vector<4x16xf32> to vector<4x16x1xf32>
    %278 = tpu.reciprocal %277 {approx = true} : vector<4x16x1xf32> -> vector<4x16x1xf32>
    %279 = vector.broadcast %278 : vector<4x16x1xf32> to vector<4x16x8xf32>
    %280 = arith.mulf %275, %279 : vector<4x16x8xf32>
    %c1_124 = arith.constant 1 : index
    %c0_125 = arith.constant 0 : index
    %c0_126 = arith.constant 0 : index
    %c0_127 = arith.constant 0 : index
    %281 = vector.load %arg20[%c1_124, %c0_125, %c0_126, %c0_127] : memref<2x4x16x8xf32, #tpu.memory_space<vmem>>, vector<1x4x16x8xf32>
    %282 = vector.shape_cast %281 : vector<1x4x16x8xf32> to vector<4x16x8xf32>
    %283 = vector.shape_cast %280 : vector<4x16x8xf32> to vector<1x4x16x8xf32>
    tpu.vector_store %arg20[%c1_124, %c0_125, %c0_126, %c0_127], %283 {strides = array<i32>} : memref<2x4x16x8xf32, #tpu.memory_space<vmem>>, vector<1x4x16x8xf32>,
    "tpu.trace_start"() <{level = 10 : i32, message = "nqk,nkd->nqd"}> : () -> ()
    %cst_128 = arith.constant dense<0.000000e+00> : vector<4x16x8xf32>
    %284 = tpu.matmul %280, %266, %cst_128 {dimension_numbers = #tpu.dot_dimension_numbers<[2], [1], [1], [2], [0, 0, 0, 1, 1, 2], [0], [0]>} : vector<4x16x8xf32>, vector<4x8x8xf32>, vector<4x16x8xf32> -> vector<4x16x8xf32>
    "tpu.trace_stop"() : () -> ()
    %c1_129 = arith.constant 1 : index
    %c0_130 = arith.constant 0 : index
    %c0_131 = arith.constant 0 : index
    %285 = vector.load %arg11[%c1_129, %c0_130, %c0_131] : memref<2x1x32xf32, #tpu.memory_space<vmem>>, vector<1x1x32xf32>
    %286 = vector.shape_cast %285 : vector<1x1x32xf32> to vector<1x32xf32>
    %287 = vector.extract_strided_slice %284 {offsets = [0, 0, 0], sizes = [1, 8, 8], strides = [1, 1, 1]} : vector<4x16x8xf32> to vector<1x8x8xf32>
    %288 = vector.shape_cast %287 : vector<1x8x8xf32> to vector<8x8xf32>
    %289 = vector.extract_strided_slice %284 {offsets = [2, 0, 0], sizes = [1, 8, 8], strides = [1, 1, 1]} : vector<4x16x8xf32> to vector<1x8x8xf32>
    %290 = vector.shape_cast %289 : vector<1x8x8xf32> to vector<8x8xf32>
    %291 = tpu.concatenate %288, %290 in 0 : vector<8x8xf32>, vector<8x8xf32> -> vector<16x8xf32>
    %c1_132 = arith.constant 1 : index
    %c0_133 = arith.constant 0 : index
    %c0_134 = arith.constant 0 : index
    %c0_135 = arith.constant 0 : index
    %292 = vector.load %arg10[%c1_132, %c0_133, %c0_134, %c0_135] : memref<2x4x8x32xf32, #tpu.memory_space<vmem>>, vector<1x1x8x32xf32>
    %293 = vector.shape_cast %292 : vector<1x1x8x32xf32> to vector<8x32xf32>
    %cst_136 = arith.constant dense<0.000000e+00> : vector<16x32xf32>
    %294 = tpu.matmul %291, %293, %cst_136 {dimension_numbers = #tpu.dot_dimension_numbers<[1], [0], [0], [1], [0, 0, 1, 1], [], []>} : vector<16x8xf32>, vector<8x32xf32>, vector<16x32xf32> -> vector<16x32xf32>
    %295 = vector.broadcast %286 : vector<1x32xf32> to vector<16x32xf32>
    %296 = arith.addf %295, %294 : vector<16x32xf32>
    %297 = vector.extract_strided_slice %284 {offsets = [0, 8, 0], sizes = [1, 8, 8], strides = [1, 1, 1]} : vector<4x16x8xf32> to vector<1x8x8xf32>
    %298 = vector.shape_cast %297 : vector<1x8x8xf32> to vector<8x8xf32>
    %299 = vector.extract_strided_slice %284 {offsets = [2, 8, 0], sizes = [1, 8, 8], strides = [1, 1, 1]} : vector<4x16x8xf32> to vector<1x8x8xf32>
    %300 = vector.shape_cast %299 : vector<1x8x8xf32> to vector<8x8xf32>
    %301 = tpu.concatenate %298, %300 in 0 : vector<8x8xf32>, vector<8x8xf32> -> vector<16x8xf32>
    %c1_137 = arith.constant 1 : index
    %c1_138 = arith.constant 1 : index
    %c0_139 = arith.constant 0 : index
    %c0_140 = arith.constant 0 : index
    %302 = vector.load %arg10[%c1_137, %c1_138, %c0_139, %c0_140] : memref<2x4x8x32xf32, #tpu.memory_space<vmem>>, vector<1x1x8x32xf32>
    %303 = vector.shape_cast %302 : vector<1x1x8x32xf32> to vector<8x32xf32>
    %cst_141 = arith.constant dense<0.000000e+00> : vector<16x32xf32>
    %304 = tpu.matmul %301, %303, %cst_141 {dimension_numbers = #tpu.dot_dimension_numbers<[1], [0], [0], [1], [0, 0, 1, 1], [], []>} : vector<16x8xf32>, vector<8x32xf32>, vector<16x32xf32> -> vector<16x32xf32>
    %305 = arith.addf %296, %304 : vector<16x32xf32>
    %306 = vector.extract_strided_slice %284 {offsets = [1, 0, 0], sizes = [1, 8, 8], strides = [1, 1, 1]} : vector<4x16x8xf32> to vector<1x8x8xf32>
    %307 = vector.shape_cast %306 : vector<1x8x8xf32> to vector<8x8xf32>
    %308 = vector.extract_strided_slice %284 {offsets = [3, 0, 0], sizes = [1, 8, 8], strides = [1, 1, 1]} : vector<4x16x8xf32> to vector<1x8x8xf32>
    %309 = vector.shape_cast %308 : vector<1x8x8xf32> to vector<8x8xf32>
    %310 = tpu.concatenate %307, %309 in 0 : vector<8x8xf32>, vector<8x8xf32> -> vector<16x8xf32>
    %c1_142 = arith.constant 1 : index
    %c2_143 = arith.constant 2 : index
    %c0_144 = arith.constant 0 : index
    %c0_145 = arith.constant 0 : index
    %311 = vector.load %arg10[%c1_142, %c2_143, %c0_144, %c0_145] : memref<2x4x8x32xf32, #tpu.memory_space<vmem>>, vector<1x1x8x32xf32>
    %312 = vector.shape_cast %311 : vector<1x1x8x32xf32> to vector<8x32xf32>
    %cst_146 = arith.constant dense<0.000000e+00> : vector<16x32xf32>
    %313 = tpu.matmul %310, %312, %cst_146 {dimension_numbers = #tpu.dot_dimension_numbers<[1], [0], [0], [1], [0, 0, 1, 1], [], []>} : vector<16x8xf32>, vector<8x32xf32>, vector<16x32xf32> -> vector<16x32xf32>
    %314 = arith.addf %305, %313 : vector<16x32xf32>
    %315 = vector.extract_strided_slice %284 {offsets = [1, 8, 0], sizes = [1, 8, 8], strides = [1, 1, 1]} : vector<4x16x8xf32> to vector<1x8x8xf32>
    %316 = vector.shape_cast %315 : vector<1x8x8xf32> to vector<8x8xf32>
    %317 = vector.extract_strided_slice %284 {offsets = [3, 8, 0], sizes = [1, 8, 8], strides = [1, 1, 1]} : vector<4x16x8xf32> to vector<1x8x8xf32>
    %318 = vector.shape_cast %317 : vector<1x8x8xf32> to vector<8x8xf32>
    %319 = tpu.concatenate %316, %318 in 0 : vector<8x8xf32>, vector<8x8xf32> -> vector<16x8xf32>
    %c1_147 = arith.constant 1 : index
    %c3_148 = arith.constant 3 : index
    %c0_149 = arith.constant 0 : index
    %c0_150 = arith.constant 0 : index
    %320 = vector.load %arg10[%c1_147, %c3_148, %c0_149, %c0_150] : memref<2x4x8x32xf32, #tpu.memory_space<vmem>>, vector<1x1x8x32xf32>
    %321 = vector.shape_cast %320 : vector<1x1x8x32xf32> to vector<8x32xf32>
    %cst_151 = arith.constant dense<0.000000e+00> : vector<16x32xf32>
    %322 = tpu.matmul %319, %321, %cst_151 {dimension_numbers = #tpu.dot_dimension_numbers<[1], [0], [0], [1], [0, 0, 1, 1], [], []>} : vector<16x8xf32>, vector<8x32xf32>, vector<16x32xf32> -> vector<16x32xf32>
    %323 = arith.addf %314, %322 : vector<16x32xf32>
    %324 = arith.addf %184, %323 : vector<16x32xf32>
    %c1_152 = arith.constant 1 : index
    %c0_153 = arith.constant 0 : index
    %c0_154 = arith.constant 0 : index
    %325 = vector.load %arg12[%c1_152, %c0_153, %c0_154] : memref<2x1x32xf32, #tpu.memory_space<vmem>>, vector<1x1x32xf32>
    %326 = vector.shape_cast %325 : vector<1x1x32xf32> to vector<1x32xf32>
    %c1_155 = arith.constant 1 : index
    %c0_156 = arith.constant 0 : index
    %c0_157 = arith.constant 0 : index
    %327 = vector.load %arg13[%c1_155, %c0_156, %c0_157] : memref<2x1x32xf32, #tpu.memory_space<vmem>>, vector<1x1x32xf32>
    %328 = vector.shape_cast %327 : vector<1x1x32xf32> to vector<1x32xf32>
    %cst_158 = arith.constant dense<0.000000e+00> : vector<16xf32>
    %329 = vector.multi_reduction <add>, %324, %cst_158 [1] : vector<16x32xf32> to vector<16xf32>
    %330 = vector.shape_cast %329 : vector<16xf32> to vector<16x1xf32>
    %cst_159 = arith.constant 3.200000e+01 : f32
    %331 = vector.broadcast %cst_159 : f32 to vector<16x1xf32>
    %332 = arith.divf %330, %331 : vector<16x1xf32>
    %333 = vector.broadcast %332 : vector<16x1xf32> to vector<16x32xf32>
    %334 = arith.subf %324, %333 : vector<16x32xf32>
    %335 = arith.mulf %334, %334 : vector<16x32xf32>
    %cst_160 = arith.constant dense<0.000000e+00> : vector<16xf32>
    %336 = vector.multi_reduction <add>, %335, %cst_160 [1] : vector<16x32xf32> to vector<16xf32>
    %337 = vector.shape_cast %336 : vector<16xf32> to vector<16x1xf32>
    %cst_161 = arith.constant 3.200000e+01 : f32
    %338 = vector.broadcast %cst_161 : f32 to vector<16x1xf32>
    %339 = arith.divf %337, %338 : vector<16x1xf32>
    %340 = vector.broadcast %332 : vector<16x1xf32> to vector<16x32xf32>
    %341 = arith.subf %324, %340 : vector<16x32xf32>
    %cst_162 = arith.constant 9.99999974E-6 : f32
    %342 = vector.broadcast %cst_162 : f32 to vector<16x1xf32>
    %343 = arith.addf %339, %342 : vector<16x1xf32>
    %344 = math.rsqrt %343 : vector<16x1xf32>
    %345 = vector.broadcast %344 : vector<16x1xf32> to vector<16x32xf32>
    %346 = arith.mulf %341, %345 : vector<16x32xf32>
    %347 = vector.broadcast %326 : vector<1x32xf32> to vector<16x32xf32>
    %348 = arith.mulf %346, %347 : vector<16x32xf32>
    %349 = vector.broadcast %328 : vector<1x32xf32> to vector<16x32xf32>
    %350 = arith.addf %348, %349 : vector<16x32xf32>
    %c1_163 = arith.constant 1 : index
    %c0_164 = arith.constant 0 : index
    %c0_165 = arith.constant 0 : index
    %351 = vector.load %arg14[%c1_163, %c0_164, %c0_165] : memref<2x32x64xf32, #tpu.memory_space<vmem>>, vector<1x32x64xf32>
    %352 = vector.shape_cast %351 : vector<1x32x64xf32> to vector<32x64xf32>
    %cst_166 = arith.constant dense<0.000000e+00> : vector<16x64xf32>
    %353 = tpu.matmul %350, %352, %cst_166 {dimension_numbers = #tpu.dot_dimension_numbers<[1], [0], [0], [1], [0, 0, 1, 1], [], []>} : vector<16x32xf32>, vector<32x64xf32>, vector<16x64xf32> -> vector<16x64xf32>
    %354 = arith.negf %353 : vector<16x64xf32>
    %355 = math.exp %354 : vector<16x64xf32>
    %cst_167 = arith.constant 1.000000e+00 : f32
    %356 = vector.broadcast %cst_167 : f32 to vector<16x64xf32>
    %357 = arith.addf %356, %355 : vector<16x64xf32>
    %358 = arith.divf %356, %357 : vector<16x64xf32>
    %359 = arith.mulf %353, %358 : vector<16x64xf32>
    %c1_168 = arith.constant 1 : index
    %c0_169 = arith.constant 0 : index
    %c0_170 = arith.constant 0 : index
    %360 = vector.load %arg15[%c1_168, %c0_169, %c0_170] : memref<2x32x64xf32, #tpu.memory_space<vmem>>, vector<1x32x64xf32>
    %361 = vector.shape_cast %360 : vector<1x32x64xf32> to vector<32x64xf32>
    %cst_171 = arith.constant dense<0.000000e+00> : vector<16x64xf32>
    %362 = tpu.matmul %350, %361, %cst_171 {dimension_numbers = #tpu.dot_dimension_numbers<[1], [0], [0], [1], [0, 0, 1, 1], [], []>} : vector<16x32xf32>, vector<32x64xf32>, vector<16x64xf32> -> vector<16x64xf32>
    %363 = arith.mulf %359, %362 : vector<16x64xf32>
    %c1_172 = arith.constant 1 : index
    %c0_173 = arith.constant 0 : index
    %c0_174 = arith.constant 0 : index
    %364 = vector.load %arg16[%c1_172, %c0_173, %c0_174] : memref<2x64x32xf32, #tpu.memory_space<vmem>>, vector<1x64x32xf32>
    %365 = vector.shape_cast %364 : vector<1x64x32xf32> to vector<64x32xf32>
    %cst_175 = arith.constant dense<0.000000e+00> : vector<16x32xf32>
    %366 = tpu.matmul %363, %365, %cst_175 {dimension_numbers = #tpu.dot_dimension_numbers<[1], [0], [0], [1], [0, 0, 1, 1], [], []>} : vector<16x64xf32>, vector<64x32xf32>, vector<16x32xf32> -> vector<16x32xf32>
    %367 = arith.addf %324, %366 : vector<16x32xf32>
    %c0_176 = arith.constant 0 : index
    %c0_177 = arith.constant 0 : index
    %368 = vector.load %arg17[%c0_176, %c0_177] : memref<1x32xf32, #tpu.memory_space<vmem>>, vector<1x32xf32>
    %c0_178 = arith.constant 0 : index
    %c0_179 = arith.constant 0 : index
    %369 = vector.load %arg18[%c0_178, %c0_179] : memref<1x32xf32, #tpu.memory_space<vmem>>, vector<1x32xf32>
    %cst_180 = arith.constant dense<0.000000e+00> : vector<16xf32>
    %370 = vector.multi_reduction <add>, %367, %cst_180 [1] : vector<16x32xf32> to vector<16xf32>
    %371 = vector.shape_cast %370 : vector<16xf32> to vector<16x1xf32>
    %cst_181 = arith.constant 3.200000e+01 : f32
    %372 = vector.broadcast %cst_181 : f32 to vector<16x1xf32>
    %373 = arith.divf %371, %372 : vector<16x1xf32>
    %374 = vector.broadcast %373 : vector<16x1xf32> to vector<16x32xf32>
    %375 = arith.subf %367, %374 : vector<16x32xf32>
    %376 = arith.mulf %375, %375 : vector<16x32xf32>
    %cst_182 = arith.constant dense<0.000000e+00> : vector<16xf32>
    %377 = vector.multi_reduction <add>, %376, %cst_182 [1] : vector<16x32xf32> to vector<16xf32>
    %378 = vector.shape_cast %377 : vector<16xf32> to vector<16x1xf32>
    %cst_183 = arith.constant 3.200000e+01 : f32
    %379 = vector.broadcast %cst_183 : f32 to vector<16x1xf32>
    %380 = arith.divf %378, %379 : vector<16x1xf32>
    %381 = vector.broadcast %373 : vector<16x1xf32> to vector<16x32xf32>
    %382 = arith.subf %367, %381 : vector<16x32xf32>
    %cst_184 = arith.constant 9.99999974E-6 : f32
    %383 = vector.broadcast %cst_184 : f32 to vector<16x1xf32>
    %384 = arith.addf %380, %383 : vector<16x1xf32>
    %385 = math.rsqrt %384 : vector<16x1xf32>
    %386 = vector.broadcast %385 : vector<16x1xf32> to vector<16x32xf32>
    %387 = arith.mulf %382, %386 : vector<16x32xf32>
    %388 = vector.broadcast %368 : vector<1x32xf32> to vector<16x32xf32>
    %389 = arith.mulf %387, %388 : vector<16x32xf32>
    %390 = vector.broadcast %369 : vector<1x32xf32> to vector<16x32xf32>
    %391 = arith.addf %389, %390 : vector<16x32xf32>
    %c0_185 = arith.constant 0 : index
    %c0_186 = arith.constant 0 : index
    %392 = vector.load %arg19[%c0_185, %c0_186] : memref<16x32xf32, #tpu.memory_space<vmem>>, vector<16x32xf32>
    tpu.vector_store %arg19[%c0_185, %c0_186], %391 {strides = array<i32>} : memref<16x32xf32, #tpu.memory_space<vmem>>, vector<16x32xf32>,
    return
  }
}

</mosaic_0001>

<llo_original>
// kernel: transformer_encoder.1
$region0: #{transformer_encoder.1}
  #allocation0 [shape = 'u32[]', space=smem, size = 0x4, offset = 0x4, fixed_abs, tag = 'smem constant byte address 0x4 - core index']
  #allocation1 [shape = 'u32[72,128]{1,0:T(1,128)}', space=vmem, size = 0x9000, scoped, tag = 'internal scratch']
  %s0 = inlined_call_operand.vmem [shape: f32[16,32], index: 0, kind: input, shape index: {}]
  %s1 = inlined_call_operand.vmem [shape: f32[4,16,8], index: 1, kind: input, shape index: {}]
  %s2 = inlined_call_operand.vmem [shape: f32[2,1,32], index: 2, kind: input, shape index: {}]
  %s3 = inlined_call_operand.vmem [shape: f32[2,1,32], index: 3, kind: input, shape index: {}]
  %s4 = inlined_call_operand.vmem [shape: f32[2,32,32], index: 4, kind: input, shape index: {}]
  %s5 = inlined_call_operand.vmem [shape: f32[2,1,32], index: 5, kind: input, shape index: {}]
  %s6 = inlined_call_operand.vmem [shape: f32[2,32,16], index: 6, kind: input, shape index: {}]
  %s7 = inlined_call_operand.vmem [shape: f32[2,1,16], index: 7, kind: input, shape index: {}]
  %s8 = inlined_call_operand.vmem [shape: f32[2,32,16], index: 8, kind: input, shape index: {}]
  %s9 = inlined_call_operand.vmem [shape: f32[2,1,16], index: 9, kind: input, shape index: {}]
  %s10 = inlined_call_operand.vmem [shape: f32[2,4,8,32], index: 10, kind: input, shape index: {}]
  %s11 = inlined_call_operand.vmem [shape: f32[2,1,32], index: 11, kind: input, shape index: {}]
  %s12 = inlined_call_operand.vmem [shape: f32[2,1,32], index: 12, kind: input, shape index: {}]
  %s13 = inlined_call_operand.vmem [shape: f32[2,1,32], index: 13, kind: input, shape index: {}]
  %s14 = inlined_call_operand.vmem [shape: f32[2,32,64], index: 14, kind: input, shape index: {}]
  %s15 = inlined_call_operand.vmem [shape: f32[2,32,64], index: 15, kind: input, shape index: {}]
  %s16 = inlined_call_operand.vmem [shape: f32[2,64,32], index: 16, kind: input, shape index: {}]
  %s17 = inlined_call_operand.vmem [shape: f32[1,32], index: 17, kind: input, shape index: {}]
  %s18 = inlined_call_operand.vmem [shape: f32[1,32], index: 18, kind: input, shape index: {}]
  %s19 = inlined_call_operand.hbm [shape: f32[16,32], index: 19, kind: output, shape index: {0}]
  %s20 = inlined_call_operand.vmem [shape: f32[2,4,16,8], index: 20, kind: output, shape index: {1}]
  %21 = xla_tuple %s19, %s20
  %s22 = sld [smem:[#allocation0]]
  $region94: #{transformer_encoder.1} parent=0
    _
  %s24 = ssub.s32 1, %s22
  %s25 = scalar_select 0, %s24, %s22
  $region1: #{transformer_encoder.1} parent=0
    #allocation2 [shape = 'u8[8192]{0}', space=vmem, size = 0x2000, scoped, tag = 'output window, operand 0, single buffered']
    #allocation3 [shape = 's32[1]{0}', space=sflag, size = 0x4, scoped, tag = 'scoped memory for transformer_encoder.1']
    %26 = vsyncpa [#allocation3], 0
    // Predicated region
    $region2: #{transformer_encoder.1} parent=1 // pred_check
      _
    $region3: #{transformer_encoder.1} parent=1 // pred_check_branch
      %28 = sbr.rel (0) target = $region5
    $region4: #{transformer_encoder.1} parent=1 // pred_region
      _
    $region5: #{transformer_encoder.1} parent=1 // pred_fallthru
      _
    // Predicated region
    $region6: #{transformer_encoder.1} parent=1 // pred_check
      _
    $region7: #{transformer_encoder.1} parent=1 // pred_check_branch
      %30 = sbr.rel (0) target = $region9
    $region8: #{transformer_encoder.1} parent=1 // pred_region
      _
    $region9: #{transformer_encoder.1} parent=1 // pred_fallthru
      _
    // Predicated region
    $region10: #{transformer_encoder.1} parent=1 // pred_check
      _
    $region11: #{transformer_encoder.1} parent=1 // pred_check_branch
      %32 = sbr.rel (0) target = $region13
    $region12: #{transformer_encoder.1} parent=1 // pred_region
      _
    $region13: #{transformer_encoder.1} parent=1 // pred_fallthru
      _
    // Predicated region
    $region14: #{transformer_encoder.1} parent=1 // pred_check
      _
    $region15: #{transformer_encoder.1} parent=1 // pred_check_branch
      %34 = sbr.rel (0) target = $region17
    $region16: #{transformer_encoder.1} parent=1 // pred_region
      _
    $region17: #{transformer_encoder.1} parent=1 // pred_fallthru
      _
    // Predicated region
    $region18: #{transformer_encoder.1} parent=1 // pred_check
      _
    $region19: #{transformer_encoder.1} parent=1 // pred_check_branch
      %36 = sbr.rel (0) target = $region21
    $region20: #{transformer_encoder.1} parent=1 // pred_region
      _
    $region21: #{transformer_encoder.1} parent=1 // pred_fallthru
      _
    // Predicated region
    $region22: #{transformer_encoder.1} parent=1 // pred_check
      _
    $region23: #{transformer_encoder.1} parent=1 // pred_check_branch
      %38 = sbr.rel (0) target = $region25
    $region24: #{transformer_encoder.1} parent=1 // pred_region
      _
    $region25: #{transformer_encoder.1} parent=1 // pred_fallthru
      _
    // Predicated region
    $region26: #{transformer_encoder.1} parent=1 // pred_check
      _
    $region27: #{transformer_encoder.1} parent=1 // pred_check_branch
      %40 = sbr.rel (0) target = $region29
    $region28: #{transformer_encoder.1} parent=1 // pred_region
      _
    $region29: #{transformer_encoder.1} parent=1 // pred_fallthru
      _
    // Predicated region
    $region30: #{transformer_encoder.1} parent=1 // pred_check
      _
    $region31: #{transformer_encoder.1} parent=1 // pred_check_branch
      %42 = sbr.rel (0) target = $region33
    $region32: #{transformer_encoder.1} parent=1 // pred_region
      _
    $region33: #{transformer_encoder.1} parent=1 // pred_fallthru
      _
    // Predicated region
    $region34: #{transformer_encoder.1} parent=1 // pred_check
      _
    $region35: #{transformer_encoder.1} parent=1 // pred_check_branch
      %44 = sbr.rel (0) target = $region37
    $region36: #{transformer_encoder.1} parent=1 // pred_region
      _
    $region37: #{transformer_encoder.1} parent=1 // pred_fallthru
      _
    // Predicated region
    $region38: #{transformer_encoder.1} parent=1 // pred_check
      _
    $region39: #{transformer_encoder.1} parent=1 // pred_check_branch
      %46 = sbr.rel (0) target = $region41
    $region40: #{transformer_encoder.1} parent=1 // pred_region
      _
    $region41: #{transformer_encoder.1} parent=1 // pred_fallthru
      _
    // Predicated region
    $region42: #{transformer_encoder.1} parent=1 // pred_check
      _
    $region43: #{transformer_encoder.1} parent=1 // pred_check_branch
      %48 = sbr.rel (0) target = $region45
    $region44: #{transformer_encoder.1} parent=1 // pred_region
      _
    $region45: #{transformer_encoder.1} parent=1 // pred_fallthru
      _
    // Predicated region
    $region46: #{transformer_encoder.1} parent=1 // pred_check
      _
    $region47: #{transformer_encoder.1} parent=1 // pred_check_branch
      %50 = sbr.rel (0) target = $region49
    $region48: #{transformer_encoder.1} parent=1 // pred_region
      _
    $region49: #{transformer_encoder.1} parent=1 // pred_fallthru
      _
    // Predicated region
    $region50: #{transformer_encoder.1} parent=1 // pred_check
      _
    $region51: #{transformer_encoder.1} parent=1 // pred_check_branch
      %52 = sbr.rel (0) target = $region53
    $region52: #{transformer_encoder.1} parent=1 // pred_region
      _
    $region53: #{transformer_encoder.1} parent=1 // pred_fallthru
      _
    // Predicated region
    $region54: #{transformer_encoder.1} parent=1 // pred_check
      _
    $region55: #{transformer_encoder.1} parent=1 // pred_check_branch
      %54 = sbr.rel (0) target = $region57
    $region56: #{transformer_encoder.1} parent=1 // pred_region
      _
    $region57: #{transformer_encoder.1} parent=1 // pred_fallthru
      _
    // Predicated region
    $region58: #{transformer_encoder.1} parent=1 // pred_check
      _
    $region59: #{transformer_encoder.1} parent=1 // pred_check_branch
      %56 = sbr.rel (0) target = $region61
    $region60: #{transformer_encoder.1} parent=1 // pred_region
      _
    $region61: #{transformer_encoder.1} parent=1 // pred_fallthru
      _
    // Predicated region
    $region62: #{transformer_encoder.1} parent=1 // pred_check
      _
    $region63: #{transformer_encoder.1} parent=1 // pred_check_branch
      %58 = sbr.rel (0) target = $region65
    $region64: #{transformer_encoder.1} parent=1 // pred_region
      _
    $region65: #{transformer_encoder.1} parent=1 // pred_fallthru
      _
    // Predicated region
    $region66: #{transformer_encoder.1} parent=1 // pred_check
      _
    $region67: #{transformer_encoder.1} parent=1 // pred_check_branch
      %60 = sbr.rel (0) target = $region69
    $region68: #{transformer_encoder.1} parent=1 // pred_region
      _
    $region69: #{transformer_encoder.1} parent=1 // pred_fallthru
      _
    // Predicated region
    $region70: #{transformer_encoder.1} parent=1 // pred_check
      _
    $region71: #{transformer_encoder.1} parent=1 // pred_check_branch
      %62 = sbr.rel (0) target = $region73
    $region72: #{transformer_encoder.1} parent=1 // pred_region
      _
    $region73: #{transformer_encoder.1} parent=1 // pred_fallthru
      _
    // Predicated region
    $region74: #{transformer_encoder.1} parent=1 // pred_check
      _
    $region75: #{transformer_encoder.1} parent=1 // pred_check_branch
      %64 = sbr.rel (0) target = $region77
    $region76: #{transformer_encoder.1} parent=1 // pred_region
      _
    $region77: #{transformer_encoder.1} parent=1 // pred_fallthru
      _
    %v65 = vld [vmem:[%s0] sm:$0xff]
    %v66 = vld [vmem:[%s0 + $0x8] sm:$0xff]
    %v67 = vld [vmem:[%s1] sm:$0xff]
    %v68 = vld [vmem:[%s1 + $0x8] sm:$0xff]
    %v69 = vld [vmem:[%s1 + $0x10] sm:$0xff]
    %v70 = vld [vmem:[%s1 + $0x18] sm:$0xff]
    %v71 = vld [vmem:[%s1 + $0x20] sm:$0xff]
    %v72 = vld [vmem:[%s1 + $0x28] sm:$0xff]
    %v73 = vld [vmem:[%s1 + $0x30] sm:$0xff]
    %v74 = vld [vmem:[%s1 + $0x38] sm:$0xff]
    %v75 = vld [vmem:[%s2] sm:$0x1]
    %v76 = vld [vmem:[%s3] sm:$0x1]
    %vm77 = vcmask 261120
    %v78 = vsel %vm77, %v65, 0.0
    %79 = vadd.xlane.f32.xlu0 %v78
    %v80 = vpop.xlane.xlu0 %79
    %v81 = vsel %vm77, %v66, 0.0
    %82 = vadd.xlane.f32.xlu0 %v81
    %v83 = vpop.xlane.xlu0 %82
    %v84 = vrcp.pop 32.0
    %v85 = vmul.f32 32.0, %v84
    %v86 = vsub.f32 1.0, %v85
    %v87 = vmul.f32 %v84, %v86
    %v88 = vadd.f32 %v84, %v87
    %vm89 = vweird.f32 %v84
    %v90 = vsel %vm89, %v84, %v88
    %v91 = vmul.f32 %v80, %v90
    %v92 = vmul.f32 %v83, %v90
    %v93 = vsub.f32 %v65, %v91
    %v94 = vsub.f32 %v66, %v92
    %v95 = vmul.f32 %v93, %v93
    %v96 = vmul.f32 %v94, %v94
    %v97 = vsel %vm77, %v95, 0.0
    %98 = vadd.xlane.f32.xlu0 %v97
    %v99 = vpop.xlane.xlu0 %98
    %v100 = vsel %vm77, %v96, 0.0
    %101 = vadd.xlane.f32.xlu0 %v100
    %v102 = vpop.xlane.xlu0 %101
    %v103 = vmul.f32 %v99, %v90
    %v104 = vmul.f32 %v102, %v90
    %v105 = vadd.f32 %v103, 1e-05
    %v106 = vadd.f32 %v104, 1e-05
    %v107 = vrsqrt.pop %v105
    %v108 = vmul.f32 %v107, %v105
    %v109 = vmul.f32 %v108, %v107
    %v110 = vmul.f32 0.5, %v109
    %v111 = vsub.f32 1.5, %v110
    %v112 = vmul.f32 %v107, %v111
    %vm113 = vweird.f32 %v105
    %vm114 = vweird.f32 %v107
    %vm115 = vmor %vm113, %vm114
    %v116 = vsel %vm115, %v107, %v112
    %v117 = vrsqrt.pop %v106
    %v118 = vmul.f32 %v117, %v106
    %v119 = vmul.f32 %v118, %v117
    %v120 = vmul.f32 0.5, %v119
    %v121 = vsub.f32 1.5, %v120
    %v122 = vmul.f32 %v117, %v121
    %vm123 = vweird.f32 %v106
    %vm124 = vweird.f32 %v117
    %vm125 = vmor %vm123, %vm124
    %v126 = vsel %vm125, %v117, %v122
    %v127 = vmul.f32 %v93, %v116
    %v128 = vmul.f32 %v94, %v126
    %v130 = vperm.slane %v75, 0
    %v132 = vmul.f32 %v127, %v130
    %v133 = vmul.f32 %v128, %v130
    %v135 = vperm.slane %v76, 0
    %v137 = vadd.f32 %v132, %v135
    %v138 = vadd.f32 %v133, %v135
    %v139 = vld [vmem:[%s4] sm:$0xff]
    %v140 = vld [vmem:[%s4 + $0x8] sm:$0xff]
    %v141 = vld [vmem:[%s4 + $0x10] sm:$0xff]
    %v142 = vld [vmem:[%s4 + $0x18] sm:$0xff]
    %v143 = vld [vmem:[%s5] sm:$0x1]
    %v145 = vperm.slane %v143, 0
    %v148 = vsel %vm77, %v137, 0
    %v151 = vsel %vm77, %v138, 0
    %153 = vmatpush.msra.mxu0 0.0
    %154 = vmatpush.msra.mxu0 0.0
    %155 = vmatpush.msra.mxu0 0.0
    %156 = vmatpush.msra.mxu0 0.0
    %157 = vmatpush.msra.mxu0 0.0
    %158 = vmatpush.msra.mxu0 0.0
    %159 = vmatpush.msra.mxu0 0.0
    %160 = vmatpush.msra.mxu0 0.0
    %161 = vmatpush.msra.mxu0 0.0
    %162 = vmatpush.msra.mxu0 0.0
    %163 = vmatpush.msra.mxu0 0.0
    %164 = vmatpush.msra.mxu0 0.0
    %165 = vmatpush.msra.mxu0 %v142
    %166 = vmatpush.msra.mxu0 %v141
    %167 = vmatpush.msra.mxu0 %v140
    %168 = vmatpush.msra.mxu0 %v139
    %169 = vmatmul.f32.gmra.mxu0 %v148
    %v170 = vpop.f32.mrf.mxu0
    %v171 = vadd.f32 %v145, %v170
    %172 = vmatmul.f32.gmra.mxu0 %v151
    %v173 = vpop.f32.mrf.mxu0
    %v174 = vadd.f32 %v145, %v173
    %175 = vdwg.mxu0
    %v176 = vld [vmem:[%s6] sm:$0xff]
    %v177 = vld [vmem:[%s6 + $0x8] sm:$0xff]
    %v178 = vld [vmem:[%s6 + $0x10] sm:$0xff]
    %v179 = vld [vmem:[%s6 + $0x18] sm:$0xff]
    %v180 = vld [vmem:[%s7] sm:$0x1]
    %v182 = vperm.slane %v180, 0
    %184 = vmatpush.msra.mxu0 0.0
    %185 = vmatpush.msra.mxu0 0.0
    %186 = vmatpush.msra.mxu0 0.0
    %187 = vmatpush.msra.mxu0 0.0
    %188 = vmatpush.msra.mxu0 0.0
    %189 = vmatpush.msra.mxu0 0.0
    %190 = vmatpush.msra.mxu0 0.0
    %191 = vmatpush.msra.mxu0 0.0
    %192 = vmatpush.msra.mxu0 0.0
    %193 = vmatpush.msra.mxu0 0.0
    %194 = vmatpush.msra.mxu0 0.0
    %195 = vmatpush.msra.mxu0 0.0
    %196 = vmatpush.msra.mxu0 %v179
    %197 = vmatpush.msra.mxu0 %v178
    %198 = vmatpush.msra.mxu0 %v177
    %199 = vmatpush.msra.mxu0 %v176
    %200 = vmatmul.f32.gmra.mxu0 %v148
    %v201 = vpop.f32.mrf.mxu0
    %v202 = vadd.f32 %v182, %v201
    %203 = vmatmul.f32.gmra.mxu0 %v151
    %v204 = vpop.f32.mrf.mxu0
    %v205 = vadd.f32 %v182, %v204
    %206 = vdwg.mxu0
    %v207 = vld [vmem:[%s8] sm:$0xff]
    %v208 = vld [vmem:[%s8 + $0x8] sm:$0xff]
    %v209 = vld [vmem:[%s8 + $0x10] sm:$0xff]
    %v210 = vld [vmem:[%s8 + $0x18] sm:$0xff]
    %v211 = vld [vmem:[%s9] sm:$0x1]
    %v213 = vperm.slane %v211, 0
    %215 = vmatpush.msra.mxu0 0.0
    %216 = vmatpush.msra.mxu0 0.0
    %217 = vmatpush.msra.mxu0 0.0
    %218 = vmatpush.msra.mxu0 0.0
    %219 = vmatpush.msra.mxu0 0.0
    %220 = vmatpush.msra.mxu0 0.0
    %221 = vmatpush.msra.mxu0 0.0
    %222 = vmatpush.msra.mxu0 0.0
    %223 = vmatpush.msra.mxu0 0.0
    %224 = vmatpush.msra.mxu0 0.0
    %225 = vmatpush.msra.mxu0 0.0
    %226 = vmatpush.msra.mxu0 0.0
    %227 = vmatpush.msra.mxu0 %v210
    %228 = vmatpush.msra.mxu0 %v209
    %229 = vmatpush.msra.mxu0 %v208
    %230 = vmatpush.msra.mxu0 %v207
    %231 = vmatmul.f32.gmra.mxu0 %v148
    %v232 = vpop.f32.mrf.mxu0
    %v233 = vadd.f32 %v213, %v232
    %234 = vmatmul.f32.gmra.mxu0 %v151
    %v235 = vpop.f32.mrf.mxu0
    %v236 = vadd.f32 %v213, %v235
    %237 = vdwg.mxu0
    %239 = vrot.lane.b32.xlu0 %v171, 120
    %v240 = vpop.permute.xlu0 %239
    %242 = vrot.lane.b32.xlu0 %v174, 120
    %v243 = vpop.permute.xlu0 %242
    %244 = vrot.lane.b32.xlu0 %v171, 112
    %v245 = vpop.permute.xlu0 %244
    %246 = vrot.lane.b32.xlu0 %v240, 112
    %v247 = vpop.permute.xlu0 %246
    %248 = vrot.lane.b32.xlu0 %v174, 112
    %v249 = vpop.permute.xlu0 %248
    %250 = vrot.lane.b32.xlu0 %v243, 112
    %v251 = vpop.permute.xlu0 %250
    %253 = vrot.lane.b32.xlu0 %v202, 120
    %v254 = vpop.permute.xlu0 %253
    %256 = vrot.lane.b32.xlu0 %v205, 120
    %v257 = vpop.permute.xlu0 %256
    %259 = vrot.lane.b32.xlu0 %v233, 120
    %v260 = vpop.permute.xlu0 %259
    %263 = vrot.lane.b32.xlu0 %v236, 120
    %v264 = vpop.permute.xlu0 %263
    %vm266 = vcmask 64512
    %v267 = vsel %vm266, %v171, 0
    %v269 = vsel %vm266, %v240, 0
    %v271 = vsel %vm266, %v202, 0
    %273 = vmatpush.xpose.msra.mxu0 0.0
    %274 = vmatpush.xpose.msra.mxu0 0.0
    %275 = vmatpush.xpose.msra.mxu0 0.0
    %276 = vmatpush.xpose.msra.mxu0 0.0
    %277 = vmatpush.xpose.msra.mxu0 0.0
    %278 = vmatpush.xpose.msra.mxu0 0.0
    %279 = vmatpush.xpose.msra.mxu0 0.0
    %280 = vmatpush.xpose.msra.mxu0 0.0
    %281 = vmatpush.xpose.msra.mxu0 0.0
    %282 = vmatpush.xpose.msra.mxu0 0.0
    %283 = vmatpush.xpose.msra.mxu0 0.0
    %284 = vmatpush.xpose.msra.mxu0 0.0
    %285 = vmatpush.xpose.msra.mxu0 0.0
    %286 = vmatpush.xpose.msra.mxu0 0.0
    %287 = vmatpush.xpose.msra.mxu0 0.0
    %288 = vmatpush.xpose.msra.mxu0 %v271
    %289 = vmatmul.f32.gmra.mxu0 %v267
    %v290 = vpop.f32.mrf.mxu0
    %v291 = vadd.f32 0.0, %v290
    %292 = vmatmul.f32.gmra.mxu0 %v269
    %v293 = vpop.f32.mrf.mxu0
    %v294 = vadd.f32 0.0, %v293
    %295 = vdwg.mxu0
    %v296 = vsel %vm266, %v245, 0
    %v298 = vsel %vm266, %v247, 0
    %v300 = vsel %vm266, %v254, 0
    %302 = vmatpush.xpose.msra.mxu0 0.0
    %303 = vmatpush.xpose.msra.mxu0 0.0
    %304 = vmatpush.xpose.msra.mxu0 0.0
    %305 = vmatpush.xpose.msra.mxu0 0.0
    %306 = vmatpush.xpose.msra.mxu0 0.0
    %307 = vmatpush.xpose.msra.mxu0 0.0
    %308 = vmatpush.xpose.msra.mxu0 0.0
    %309 = vmatpush.xpose.msra.mxu0 0.0
    %310 = vmatpush.xpose.msra.mxu0 0.0
    %311 = vmatpush.xpose.msra.mxu0 0.0
    %312 = vmatpush.xpose.msra.mxu0 0.0
    %313 = vmatpush.xpose.msra.mxu0 0.0
    %314 = vmatpush.xpose.msra.mxu0 0.0
    %315 = vmatpush.xpose.msra.mxu0 0.0
    %316 = vmatpush.xpose.msra.mxu0 0.0
    %317 = vmatpush.xpose.msra.mxu0 %v300
    %318 = vmatmul.f32.gmra.mxu0 %v296
    %v319 = vpop.f32.mrf.mxu0
    %v320 = vadd.f32 0.0, %v319
    %321 = vmatmul.f32.gmra.mxu0 %v298
    %v322 = vpop.f32.mrf.mxu0
    %v323 = vadd.f32 0.0, %v322
    %324 = vdwg.mxu0
    %v325 = vsel %vm266, %v174, 0
    %v327 = vsel %vm266, %v243, 0
    %v329 = vsel %vm266, %v205, 0
    %331 = vmatpush.xpose.msra.mxu0 0.0
    %332 = vmatpush.xpose.msra.mxu0 0.0
    %333 = vmatpush.xpose.msra.mxu0 0.0
    %334 = vmatpush.xpose.msra.mxu0 0.0
    %335 = vmatpush.xpose.msra.mxu0 0.0
    %336 = vmatpush.xpose.msra.mxu0 0.0
    %337 = vmatpush.xpose.msra.mxu0 0.0
    %338 = vmatpush.xpose.msra.mxu0 0.0
    %339 = vmatpush.xpose.msra.mxu0 0.0
    %340 = vmatpush.xpose.msra.mxu0 0.0
    %341 = vmatpush.xpose.msra.mxu0 0.0
    %342 = vmatpush.xpose.msra.mxu0 0.0
    %343 = vmatpush.xpose.msra.mxu0 0.0
    %344 = vmatpush.xpose.msra.mxu0 0.0
    %345 = vmatpush.xpose.msra.mxu0 0.0
    %346 = vmatpush.xpose.msra.mxu0 %v329
    %347 = vmatmul.f32.gmra.mxu0 %v325
    %v348 = vpop.f32.mrf.mxu0
    %v349 = vadd.f32 0.0, %v348
    %350 = vmatmul.f32.gmra.mxu0 %v327
    %v351 = vpop.f32.mrf.mxu0
    %v352 = vadd.f32 0.0, %v351
    %353 = vdwg.mxu0
    %v354 = vsel %vm266, %v249, 0
    %v356 = vsel %vm266, %v251, 0
    %v358 = vsel %vm266, %v257, 0
    %360 = vmatpush.xpose.msra.mxu0 0.0
    %361 = vmatpush.xpose.msra.mxu0 0.0
    %362 = vmatpush.xpose.msra.mxu0 0.0
    %363 = vmatpush.xpose.msra.mxu0 0.0
    %364 = vmatpush.xpose.msra.mxu0 0.0
    %365 = vmatpush.xpose.msra.mxu0 0.0
    %366 = vmatpush.xpose.msra.mxu0 0.0
    %367 = vmatpush.xpose.msra.mxu0 0.0
    %368 = vmatpush.xpose.msra.mxu0 0.0
    %369 = vmatpush.xpose.msra.mxu0 0.0
    %370 = vmatpush.xpose.msra.mxu0 0.0
    %371 = vmatpush.xpose.msra.mxu0 0.0
    %372 = vmatpush.xpose.msra.mxu0 0.0
    %373 = vmatpush.xpose.msra.mxu0 0.0
    %374 = vmatpush.xpose.msra.mxu0 0.0
    %375 = vmatpush.xpose.msra.mxu0 %v358
    %376 = vmatmul.f32.gmra.mxu0 %v354
    %v377 = vpop.f32.mrf.mxu0
    %v378 = vadd.f32 0.0, %v377
    %379 = vmatmul.f32.gmra.mxu0 %v356
    %v380 = vpop.f32.mrf.mxu0
    %v381 = vadd.f32 0.0, %v380
    %382 = vdwg.mxu0
    %v383 = vmul.f32 %v291, 0.35355338
    %v384 = vmul.f32 %v294, 0.35355338
    %v385 = vmul.f32 %v320, 0.35355338
    %v386 = vmul.f32 %v323, 0.35355338
    %v387 = vmul.f32 %v349, 0.35355338
    %v388 = vmul.f32 %v352, 0.35355338
    %v389 = vmul.f32 %v378, 0.35355338
    %v390 = vmul.f32 %v381, 0.35355338
    %v391 = vadd.f32 %v383, %v67
    %v392 = vadd.f32 %v384, %v68
    %v393 = vadd.f32 %v385, %v69
    %v394 = vadd.f32 %v386, %v70
    %v395 = vadd.f32 %v387, %v71
    %v396 = vadd.f32 %v388, %v72
    %v397 = vadd.f32 %v389, %v73
    %v398 = vadd.f32 %v390, %v74
    %v399 = vsel %vm266, %v391, -inf
    %400 = vmax.xlane.f32.xlu0 %v399
    %v401 = vpop.xlane.xlu0 %400
    %v402 = vsel %vm266, %v392, -inf
    %403 = vmax.xlane.f32.xlu0 %v402
    %v404 = vpop.xlane.xlu0 %403
    %v405 = vsel %vm266, %v393, -inf
    %406 = vmax.xlane.f32.xlu0 %v405
    %v407 = vpop.xlane.xlu0 %406
    %v408 = vsel %vm266, %v394, -inf
    %409 = vmax.xlane.f32.xlu0 %v408
    %v410 = vpop.xlane.xlu0 %409
    %v411 = vsel %vm266, %v395, -inf
    %412 = vmax.xlane.f32.xlu0 %v411
    %v413 = vpop.xlane.xlu0 %412
    %v414 = vsel %vm266, %v396, -inf
    %415 = vmax.xlane.f32.xlu0 %v414
    %v416 = vpop.xlane.xlu0 %415
    %v417 = vsel %vm266, %v397, -inf
    %418 = vmax.xlane.f32.xlu0 %v417
    %v419 = vpop.xlane.xlu0 %418
    %v420 = vsel %vm266, %v398, -inf
    %421 = vmax.xlane.f32.xlu0 %v420
    %v422 = vpop.xlane.xlu0 %421
    %v423 = vsub.f32 %v391, %v401
    %v424 = vsub.f32 %v392, %v404
    %v425 = vsub.f32 %v393, %v407
    %v426 = vsub.f32 %v394, %v410
    %v427 = vsub.f32 %v395, %v413
    %v428 = vsub.f32 %v396, %v416
    %v429 = vsub.f32 %v397, %v419
    %v430 = vsub.f32 %v398, %v422
    %v431 = vmul.f32 %v423, 1.442695
    %v432 = vpow.pop %v431
    %v433 = vmul.f32 %v424, 1.442695
    %v434 = vpow.pop %v433
    %v435 = vmul.f32 %v425, 1.442695
    %v436 = vpow.pop %v435
    %v437 = vmul.f32 %v426, 1.442695
    %v438 = vpow.pop %v437
    %v439 = vmul.f32 %v427, 1.442695
    %v440 = vpow.pop %v439
    %v441 = vmul.f32 %v428, 1.442695
    %v442 = vpow.pop %v441
    %v443 = vmul.f32 %v429, 1.442695
    %v444 = vpow.pop %v443
    %v445 = vmul.f32 %v430, 1.442695
    %v446 = vpow.pop %v445
    %v447 = vsel %vm266, %v432, 0.0
    %448 = vadd.xlane.f32.xlu0 %v447
    %v449 = vpop.xlane.xlu0 %448
    %v450 = vsel %vm266, %v434, 0.0
    %451 = vadd.xlane.f32.xlu0 %v450
    %v452 = vpop.xlane.xlu0 %451
    %v453 = vsel %vm266, %v436, 0.0
    %454 = vadd.xlane.f32.xlu0 %v453
    %v455 = vpop.xlane.xlu0 %454
    %v456 = vsel %vm266, %v438, 0.0
    %457 = vadd.xlane.f32.xlu0 %v456
    %v458 = vpop.xlane.xlu0 %457
    %v459 = vsel %vm266, %v440, 0.0
    %460 = vadd.xlane.f32.xlu0 %v459
    %v461 = vpop.xlane.xlu0 %460
    %v462 = vsel %vm266, %v442, 0.0
    %463 = vadd.xlane.f32.xlu0 %v462
    %v464 = vpop.xlane.xlu0 %463
    %v465 = vsel %vm266, %v444, 0.0
    %466 = vadd.xlane.f32.xlu0 %v465
    %v467 = vpop.xlane.xlu0 %466
    %v468 = vsel %vm266, %v446, 0.0
    %469 = vadd.xlane.f32.xlu0 %v468
    %v470 = vpop.xlane.xlu0 %469
    %v471 = vrcp.pop %v449
    %v472 = vrcp.pop %v452
    %v473 = vrcp.pop %v455
    %v474 = vrcp.pop %v458
    %v475 = vrcp.pop %v461
    %v476 = vrcp.pop %v464
    %v477 = vrcp.pop %v467
    %v478 = vrcp.pop %v470
    %v479 = vmul.f32 %v432, %v471
    %v480 = vmul.f32 %v434, %v472
    %v481 = vmul.f32 %v436, %v473
    %v482 = vmul.f32 %v438, %v474
    %v483 = vmul.f32 %v440, %v475
    %v484 = vmul.f32 %v442, %v476
    %v485 = vmul.f32 %v444, %v477
    %v486 = vmul.f32 %v446, %v478
    %487 = vst.msk [vmem:[%s20] sm:$0xff] %vm266, %v479
    %488 = vst.msk [vmem:[%s20 + $0x8] sm:$0xff] %vm266, %v480
    %489 = vst.msk [vmem:[%s20 + $0x10] sm:$0xff] %vm266, %v481
    %490 = vst.msk [vmem:[%s20 + $0x18] sm:$0xff] %vm266, %v482
    %491 = vst.msk [vmem:[%s20 + $0x20] sm:$0xff] %vm266, %v483
    %492 = vst.msk [vmem:[%s20 + $0x28] sm:$0xff] %vm266, %v484
    %493 = vst.msk [vmem:[%s20 + $0x30] sm:$0xff] %vm266, %v485
    %494 = vst.msk [vmem:[%s20 + $0x38] sm:$0xff] %vm266, %v486
    %v496 = vsel %vm266, %v479, 0
    %v499 = vsel %vm266, %v480, 0
    %501 = vmatpush.msra.mxu0 0.0
    %502 = vmatpush.msra.mxu0 0.0
    %503 = vmatpush.msra.mxu0 0.0
    %504 = vmatpush.msra.mxu0 0.0
    %505 = vmatpush.msra.mxu0 0.0
    %506 = vmatpush.msra.mxu0 0.0
    %507 = vmatpush.msra.mxu0 0.0
    %508 = vmatpush.msra.mxu0 0.0
    %509 = vmatpush.msra.mxu0 0.0
    %510 = vmatpush.msra.mxu0 0.0
    %511 = vmatpush.msra.mxu0 0.0
    %512 = vmatpush.msra.mxu0 0.0
    %513 = vmatpush.msra.mxu0 0.0
    %514 = vmatpush.msra.mxu0 0.0
    %515 = vmatpush.msra.mxu0 0.0
    %516 = vmatpush.msra.mxu0 %v233
    %517 = vmatmul.f32.gmra.mxu0 %v496
    %v518 = vpop.f32.mrf.mxu0
    %v519 = vadd.f32 0.0, %v518
    %520 = vmatmul.f32.gmra.mxu0 %v499
    %v521 = vpop.f32.mrf.mxu0
    %v522 = vadd.f32 0.0, %v521
    %523 = vdwg.mxu0
    %v525 = vsel %vm266, %v481, 0
    %v528 = vsel %vm266, %v482, 0
    %530 = vmatpush.msra.mxu0 0.0
    %531 = vmatpush.msra.mxu0 0.0
    %532 = vmatpush.msra.mxu0 0.0
    %533 = vmatpush.msra.mxu0 0.0
    %534 = vmatpush.msra.mxu0 0.0
    %535 = vmatpush.msra.mxu0 0.0
    %536 = vmatpush.msra.mxu0 0.0
    %537 = vmatpush.msra.mxu0 0.0
    %538 = vmatpush.msra.mxu0 0.0
    %539 = vmatpush.msra.mxu0 0.0
    %540 = vmatpush.msra.mxu0 0.0
    %541 = vmatpush.msra.mxu0 0.0
    %542 = vmatpush.msra.mxu0 0.0
    %543 = vmatpush.msra.mxu0 0.0
    %544 = vmatpush.msra.mxu0 0.0
    %545 = vmatpush.msra.mxu0 %v260
    %546 = vmatmul.f32.gmra.mxu0 %v525
    %v547 = vpop.f32.mrf.mxu0
    %v548 = vadd.f32 0.0, %v547
    %549 = vmatmul.f32.gmra.mxu0 %v528
    %v550 = vpop.f32.mrf.mxu0
    %v551 = vadd.f32 0.0, %v550
    %552 = vdwg.mxu0
    %v554 = vsel %vm266, %v483, 0
    %v557 = vsel %vm266, %v484, 0
    %559 = vmatpush.msra.mxu0 0.0
    %560 = vmatpush.msra.mxu0 0.0
    %561 = vmatpush.msra.mxu0 0.0
    %562 = vmatpush.msra.mxu0 0.0
    %563 = vmatpush.msra.mxu0 0.0
    %564 = vmatpush.msra.mxu0 0.0
    %565 = vmatpush.msra.mxu0 0.0
    %566 = vmatpush.msra.mxu0 0.0
    %567 = vmatpush.msra.mxu0 0.0
    %568 = vmatpush.msra.mxu0 0.0
    %569 = vmatpush.msra.mxu0 0.0
    %570 = vmatpush.msra.mxu0 0.0
    %571 = vmatpush.msra.mxu0 0.0
    %572 = vmatpush.msra.mxu0 0.0
    %573 = vmatpush.msra.mxu0 0.0
    %574 = vmatpush.msra.mxu0 %v236
    %575 = vmatmul.f32.gmra.mxu0 %v554
    %v576 = vpop.f32.mrf.mxu0
    %v577 = vadd.f32 0.0, %v576
    %578 = vmatmul.f32.gmra.mxu0 %v557
    %v579 = vpop.f32.mrf.mxu0
    %v580 = vadd.f32 0.0, %v579
    %581 = vdwg.mxu0
    %v583 = vsel %vm266, %v485, 0
    %v586 = vsel %vm266, %v486, 0
    %588 = vmatpush.msra.mxu0 0.0
    %589 = vmatpush.msra.mxu0 0.0
    %590 = vmatpush.msra.mxu0 0.0
    %591 = vmatpush.msra.mxu0 0.0
    %592 = vmatpush.msra.mxu0 0.0
    %593 = vmatpush.msra.mxu0 0.0
    %594 = vmatpush.msra.mxu0 0.0
    %595 = vmatpush.msra.mxu0 0.0
    %596 = vmatpush.msra.mxu0 0.0
    %597 = vmatpush.msra.mxu0 0.0
    %598 = vmatpush.msra.mxu0 0.0
    %599 = vmatpush.msra.mxu0 0.0
    %600 = vmatpush.msra.mxu0 0.0
    %601 = vmatpush.msra.mxu0 0.0
    %602 = vmatpush.msra.mxu0 0.0
    %603 = vmatpush.msra.mxu0 %v264
    %604 = vmatmul.f32.gmra.mxu0 %v583
    %v605 = vpop.f32.mrf.mxu0
    %v606 = vadd.f32 0.0, %v605
    %607 = vmatmul.f32.gmra.mxu0 %v586
    %v608 = vpop.f32.mrf.mxu0
    %v609 = vadd.f32 0.0, %v608
    %610 = vdwg.mxu0
    %v611 = vld [vmem:[%s11] sm:$0x1]
    %v612 = vld [vmem:[%s10] sm:$0xff]
    %v614 = vsel %vm266, %v519, 0
    %v617 = vsel %vm266, %v577, 0
    %619 = vmatpush.msra.mxu0 0.0
    %620 = vmatpush.msra.mxu0 0.0
    %621 = vmatpush.msra.mxu0 0.0
    %622 = vmatpush.msra.mxu0 0.0
    %623 = vmatpush.msra.mxu0 0.0
    %624 = vmatpush.msra.mxu0 0.0
    %625 = vmatpush.msra.mxu0 0.0
    %626 = vmatpush.msra.mxu0 0.0
    %627 = vmatpush.msra.mxu0 0.0
    %628 = vmatpush.msra.mxu0 0.0
    %629 = vmatpush.msra.mxu0 0.0
    %630 = vmatpush.msra.mxu0 0.0
    %631 = vmatpush.msra.mxu0 0.0
    %632 = vmatpush.msra.mxu0 0.0
    %633 = vmatpush.msra.mxu0 0.0
    %634 = vmatpush.msra.mxu0 %v612
    %635 = vmatmul.f32.gmra.mxu0 %v614
    %v636 = vpop.f32.mrf.mxu0
    %v637 = vadd.f32 0.0, %v636
    %638 = vmatmul.f32.gmra.mxu0 %v617
    %v639 = vpop.f32.mrf.mxu0
    %v640 = vadd.f32 0.0, %v639
    %641 = vdwg.mxu0
    %v643 = vperm.slane %v611, 0
    %v645 = vadd.f32 %v643, %v637
    %v646 = vadd.f32 %v643, %v640
    %s647 = scalar_lea.vmem %s10, 8
    %v648 = vld [vmem:[%s647] sm:$0xff]
    %v650 = vsel %vm266, %v522, 0
    %v653 = vsel %vm266, %v580, 0
    %655 = vmatpush.msra.mxu0 0.0
    %656 = vmatpush.msra.mxu0 0.0
    %657 = vmatpush.msra.mxu0 0.0
    %658 = vmatpush.msra.mxu0 0.0
    %659 = vmatpush.msra.mxu0 0.0
    %660 = vmatpush.msra.mxu0 0.0
    %661 = vmatpush.msra.mxu0 0.0
    %662 = vmatpush.msra.mxu0 0.0
    %663 = vmatpush.msra.mxu0 0.0
    %664 = vmatpush.msra.mxu0 0.0
    %665 = vmatpush.msra.mxu0 0.0
    %666 = vmatpush.msra.mxu0 0.0
    %667 = vmatpush.msra.mxu0 0.0
    %668 = vmatpush.msra.mxu0 0.0
    %669 = vmatpush.msra.mxu0 0.0
    %670 = vmatpush.msra.mxu0 %v648
    %671 = vmatmul.f32.gmra.mxu0 %v650
    %v672 = vpop.f32.mrf.mxu0
    %v673 = vadd.f32 0.0, %v672
    %674 = vmatmul.f32.gmra.mxu0 %v653
    %v675 = vpop.f32.mrf.mxu0
    %v676 = vadd.f32 0.0, %v675
    %677 = vdwg.mxu0
    %v678 = vadd.f32 %v645, %v673
    %v679 = vadd.f32 %v646, %v676
    %s680 = scalar_lea.vmem %s10, 16
    %v681 = vld [vmem:[%s680] sm:$0xff]
    %v683 = vsel %vm266, %v548, 0
    %v686 = vsel %vm266, %v606, 0
    %688 = vmatpush.msra.mxu0 0.0
    %689 = vmatpush.msra.mxu0 0.0
    %690 = vmatpush.msra.mxu0 0.0
    %691 = vmatpush.msra.mxu0 0.0
    %692 = vmatpush.msra.mxu0 0.0
    %693 = vmatpush.msra.mxu0 0.0
    %694 = vmatpush.msra.mxu0 0.0
    %695 = vmatpush.msra.mxu0 0.0
    %696 = vmatpush.msra.mxu0 0.0
    %697 = vmatpush.msra.mxu0 0.0
    %698 = vmatpush.msra.mxu0 0.0
    %699 = vmatpush.msra.mxu0 0.0
    %700 = vmatpush.msra.mxu0 0.0
    %701 = vmatpush.msra.mxu0 0.0
    %702 = vmatpush.msra.mxu0 0.0
    %703 = vmatpush.msra.mxu0 %v681
    %704 = vmatmul.f32.gmra.mxu0 %v683
    %v705 = vpop.f32.mrf.mxu0
    %v706 = vadd.f32 0.0, %v705
    %707 = vmatmul.f32.gmra.mxu0 %v686
    %v708 = vpop.f32.mrf.mxu0
    %v709 = vadd.f32 0.0, %v708
    %710 = vdwg.mxu0
    %v711 = vadd.f32 %v678, %v706
    %v712 = vadd.f32 %v679, %v709
    %s713 = scalar_lea.vmem %s10, 24
    %v714 = vld [vmem:[%s713] sm:$0xff]
    %v716 = vsel %vm266, %v551, 0
    %v719 = vsel %vm266, %v609, 0
    %721 = vmatpush.msra.mxu0 0.0
    %722 = vmatpush.msra.mxu0 0.0
    %723 = vmatpush.msra.mxu0 0.0
    %724 = vmatpush.msra.mxu0 0.0
    %725 = vmatpush.msra.mxu0 0.0
    %726 = vmatpush.msra.mxu0 0.0
    %727 = vmatpush.msra.mxu0 0.0
    %728 = vmatpush.msra.mxu0 0.0
    %729 = vmatpush.msra.mxu0 0.0
    %730 = vmatpush.msra.mxu0 0.0
    %731 = vmatpush.msra.mxu0 0.0
    %732 = vmatpush.msra.mxu0 0.0
    %733 = vmatpush.msra.mxu0 0.0
    %734 = vmatpush.msra.mxu0 0.0
    %735 = vmatpush.msra.mxu0 0.0
    %736 = vmatpush.msra.mxu0 %v714
    %737 = vmatmul.f32.gmra.mxu0 %v716
    %v738 = vpop.f32.mrf.mxu0
    %v739 = vadd.f32 0.0, %v738
    %740 = vmatmul.f32.gmra.mxu0 %v719
    %v741 = vpop.f32.mrf.mxu0
    %v742 = vadd.f32 0.0, %v741
    %743 = vdwg.mxu0
    %v744 = vadd.f32 %v711, %v739
    %v745 = vadd.f32 %v712, %v742
    %v746 = vadd.f32 %v65, %v744
    %v747 = vadd.f32 %v66, %v745
    %v748 = vld [vmem:[%s12] sm:$0x1]
    %v749 = vld [vmem:[%s13] sm:$0x1]
    %v750 = vsel %vm77, %v746, 0.0
    %751 = vadd.xlane.f32.xlu0 %v750
    %v752 = vpop.xlane.xlu0 %751
    %v753 = vsel %vm77, %v747, 0.0
    %754 = vadd.xlane.f32.xlu0 %v753
    %v755 = vpop.xlane.xlu0 %754
    %v756 = vmul.f32 %v752, %v90
    %v757 = vmul.f32 %v755, %v90
    %v758 = vsub.f32 %v746, %v756
    %v759 = vsub.f32 %v747, %v757
    %v760 = vmul.f32 %v758, %v758
    %v761 = vmul.f32 %v759, %v759
    %v762 = vsel %vm77, %v760, 0.0
    %763 = vadd.xlane.f32.xlu0 %v762
    %v764 = vpop.xlane.xlu0 %763
    %v765 = vsel %vm77, %v761, 0.0
    %766 = vadd.xlane.f32.xlu0 %v765
    %v767 = vpop.xlane.xlu0 %766
    %v768 = vmul.f32 %v764, %v90
    %v769 = vmul.f32 %v767, %v90
    %v770 = vadd.f32 %v768, 1e-05
    %v771 = vadd.f32 %v769, 1e-05
    %v772 = vrsqrt.pop %v770
    %v773 = vmul.f32 %v772, %v770
    %v774 = vmul.f32 %v773, %v772
    %v775 = vmul.f32 0.5, %v774
    %v776 = vsub.f32 1.5, %v775
    %v777 = vmul.f32 %v772, %v776
    %vm778 = vweird.f32 %v770
    %vm779 = vweird.f32 %v772
    %vm780 = vmor %vm778, %vm779
    %v781 = vsel %vm780, %v772, %v777
    %v782 = vrsqrt.pop %v771
    %v783 = vmul.f32 %v782, %v771
    %v784 = vmul.f32 %v783, %v782
    %v785 = vmul.f32 0.5, %v784
    %v786 = vsub.f32 1.5, %v785
    %v787 = vmul.f32 %v782, %v786
    %vm788 = vweird.f32 %v771
    %vm789 = vweird.f32 %v782
    %vm790 = vmor %vm788, %vm789
    %v791 = vsel %vm790, %v782, %v787
    %v792 = vmul.f32 %v758, %v781
    %v793 = vmul.f32 %v759, %v791
    %v795 = vperm.slane %v748, 0
    %v797 = vmul.f32 %v792, %v795
    %v798 = vmul.f32 %v793, %v795
    %v800 = vperm.slane %v749, 0
    %v802 = vadd.f32 %v797, %v800
    %v803 = vadd.f32 %v798, %v800
    %v804 = vld [vmem:[%s14] sm:$0xff]
    %v805 = vld [vmem:[%s14 + $0x8] sm:$0xff]
    %v806 = vld [vmem:[%s14 + $0x10] sm:$0xff]
    %v807 = vld [vmem:[%s14 + $0x18] sm:$0xff]
    %v809 = vsel %vm77, %v802, 0
    %v812 = vsel %vm77, %v803, 0
    %814 = vmatpush.msra.mxu0 0.0
    %815 = vmatpush.msra.mxu0 0.0
    %816 = vmatpush.msra.mxu0 0.0
    %817 = vmatpush.msra.mxu0 0.0
    %818 = vmatpush.msra.mxu0 0.0
    %819 = vmatpush.msra.mxu0 0.0
    %820 = vmatpush.msra.mxu0 0.0
    %821 = vmatpush.msra.mxu0 0.0
    %822 = vmatpush.msra.mxu0 0.0
    %823 = vmatpush.msra.mxu0 0.0
    %824 = vmatpush.msra.mxu0 0.0
    %825 = vmatpush.msra.mxu0 0.0
    %826 = vmatpush.msra.mxu0 %v807
    %827 = vmatpush.msra.mxu0 %v806
    %828 = vmatpush.msra.mxu0 %v805
    %829 = vmatpush.msra.mxu0 %v804
    %830 = vmatmul.f32.gmra.mxu0 %v809
    %v831 = vpop.f32.mrf.mxu0
    %v832 = vadd.f32 0.0, %v831
    %833 = vmatmul.f32.gmra.mxu0 %v812
    %v834 = vpop.f32.mrf.mxu0
    %v835 = vadd.f32 0.0, %v834
    %836 = vdwg.mxu0
    %v837 = vxor.u32 %v832, 2147483648
    %v838 = vxor.u32 %v835, 2147483648
    %v839 = vmul.f32 %v837, 1.442695
    %v840 = vpow.pop %v839
    %v841 = vmul.f32 %v838, 1.442695
    %v842 = vpow.pop %v841
    %v843 = vadd.f32 %v840, 1.0
    %v844 = vadd.f32 %v842, 1.0
    %v845 = vrcp.pop %v843
    %v846 = vmul.f32 %v843, %v845
    %v847 = vsub.f32 1.0, %v846
    %v848 = vmul.f32 %v845, %v847
    %v849 = vadd.f32 %v845, %v848
    %vm850 = vweird.f32 %v843
    %vm851 = vweird.f32 %v845
    %vm852 = vmor %vm850, %vm851
    %v853 = vsel %vm852, %v845, %v849
    %v854 = vand.u32 2147483647, %v843
    %vm855 = vcmp.eq.f32.partialorder %v854, 8.507059e+37
    %v856 = vand.u32 %v843, 2147483648
    %v857 = vor.u32 1.1754944e-38, %v856
    %v858 = vsel %vm855, %v857, %v853
    %v859 = vmul.f32 1.0, %v858
    %v860 = vrcp.pop %v844
    %v861 = vmul.f32 %v844, %v860
    %v862 = vsub.f32 1.0, %v861
    %v863 = vmul.f32 %v860, %v862
    %v864 = vadd.f32 %v860, %v863
    %vm865 = vweird.f32 %v844
    %vm866 = vweird.f32 %v860
    %vm867 = vmor %vm865, %vm866
    %v868 = vsel %vm867, %v860, %v864
    %v869 = vand.u32 2147483647, %v844
    %vm870 = vcmp.eq.f32.partialorder %v869, 8.507059e+37
    %v871 = vand.u32 %v844, 2147483648
    %v872 = vor.u32 1.1754944e-38, %v871
    %v873 = vsel %vm870, %v872, %v868
    %v874 = vmul.f32 1.0, %v873
    %v875 = vmul.f32 %v832, %v859
    %v876 = vmul.f32 %v835, %v874
    %v877 = vld [vmem:[%s15] sm:$0xff]
    %v878 = vld [vmem:[%s15 + $0x8] sm:$0xff]
    %v879 = vld [vmem:[%s15 + $0x10] sm:$0xff]
    %v880 = vld [vmem:[%s15 + $0x18] sm:$0xff]
    %881 = vmatpush.msra.mxu0 0.0
    %882 = vmatpush.msra.mxu0 0.0
    %883 = vmatpush.msra.mxu0 0.0
    %884 = vmatpush.msra.mxu0 0.0
    %885 = vmatpush.msra.mxu0 0.0
    %886 = vmatpush.msra.mxu0 0.0
    %887 = vmatpush.msra.mxu0 0.0
    %888 = vmatpush.msra.mxu0 0.0
    %889 = vmatpush.msra.mxu0 0.0
    %890 = vmatpush.msra.mxu0 0.0
    %891 = vmatpush.msra.mxu0 0.0
    %892 = vmatpush.msra.mxu0 0.0
    %893 = vmatpush.msra.mxu0 %v880
    %894 = vmatpush.msra.mxu0 %v879
    %895 = vmatpush.msra.mxu0 %v878
    %896 = vmatpush.msra.mxu0 %v877
    %897 = vmatmul.f32.gmra.mxu0 %v809
    %v898 = vpop.f32.mrf.mxu0
    %v899 = vadd.f32 0.0, %v898
    %900 = vmatmul.f32.gmra.mxu0 %v812
    %v901 = vpop.f32.mrf.mxu0
    %v902 = vadd.f32 0.0, %v901
    %903 = vdwg.mxu0
    %v904 = vmul.f32 %v875, %v899
    %v905 = vmul.f32 %v876, %v902
    %v906 = vld [vmem:[%s16] sm:$0xff]
    %v907 = vld [vmem:[%s16 + $0x8] sm:$0xff]
    %v908 = vld [vmem:[%s16 + $0x10] sm:$0xff]
    %v909 = vld [vmem:[%s16 + $0x18] sm:$0xff]
    %v910 = vld [vmem:[%s16 + $0x20] sm:$0xff]
    %v911 = vld [vmem:[%s16 + $0x28] sm:$0xff]
    %v912 = vld [vmem:[%s16 + $0x30] sm:$0xff]
    %v913 = vld [vmem:[%s16 + $0x38] sm:$0xff]
    %vm914 = vcmask 523264
    %v916 = vsel %vm914, %v904, 0
    %v919 = vsel %vm914, %v905, 0
    %921 = vmatpush.msra.mxu0 0.0
    %922 = vmatpush.msra.mxu0 0.0
    %923 = vmatpush.msra.mxu0 0.0
    %924 = vmatpush.msra.mxu0 0.0
    %925 = vmatpush.msra.mxu0 0.0
    %926 = vmatpush.msra.mxu0 0.0
    %927 = vmatpush.msra.mxu0 0.0
    %928 = vmatpush.msra.mxu0 0.0
    %929 = vmatpush.msra.mxu0 %v913
    %930 = vmatpush.msra.mxu0 %v912
    %931 = vmatpush.msra.mxu0 %v911
    %932 = vmatpush.msra.mxu0 %v910
    %933 = vmatpush.msra.mxu0 %v909
    %934 = vmatpush.msra.mxu0 %v908
    %935 = vmatpush.msra.mxu0 %v907
    %936 = vmatpush.msra.mxu0 %v906
    %937 = vmatmul.f32.gmra.mxu0 %v916
    %v938 = vpop.f32.mrf.mxu0
    %v939 = vadd.f32 0.0, %v938
    %940 = vmatmul.f32.gmra.mxu0 %v919
    %v941 = vpop.f32.mrf.mxu0
    %v942 = vadd.f32 0.0, %v941
    %943 = vdwg.mxu0
    %v944 = vadd.f32 %v746, %v939
    %v945 = vadd.f32 %v747, %v942
    %s946 = scalar_lea.vmem %s2, 1
    %v947 = vld [vmem:[%s946] sm:$0x1]
    %s948 = scalar_lea.vmem %s3, 1
    %v949 = vld [vmem:[%s948] sm:$0x1]
    %v950 = vsel %vm77, %v944, 0.0
    %951 = vadd.xlane.f32.xlu0 %v950
    %v952 = vpop.xlane.xlu0 %951
    %v953 = vsel %vm77, %v945, 0.0
    %954 = vadd.xlane.f32.xlu0 %v953
    %v955 = vpop.xlane.xlu0 %954
    %v956 = vmul.f32 %v952, %v90
    %v957 = vmul.f32 %v955, %v90
    %v958 = vsub.f32 %v944, %v956
    %v959 = vsub.f32 %v945, %v957
    %v960 = vmul.f32 %v958, %v958
    %v961 = vmul.f32 %v959, %v959
    %v962 = vsel %vm77, %v960, 0.0
    %963 = vadd.xlane.f32.xlu0 %v962
    %v964 = vpop.xlane.xlu0 %963
    %v965 = vsel %vm77, %v961, 0.0
    %966 = vadd.xlane.f32.xlu0 %v965
    %v967 = vpop.xlane.xlu0 %966
    %v968 = vmul.f32 %v964, %v90
    %v969 = vmul.f32 %v967, %v90
    %v970 = vadd.f32 %v968, 1e-05
    %v971 = vadd.f32 %v969, 1e-05
    %v972 = vrsqrt.pop %v970
    %v973 = vmul.f32 %v972, %v970
    %v974 = vmul.f32 %v973, %v972
    %v975 = vmul.f32 0.5, %v974
    %v976 = vsub.f32 1.5, %v975
    %v977 = vmul.f32 %v972, %v976
    %vm978 = vweird.f32 %v970
    %vm979 = vweird.f32 %v972
    %vm980 = vmor %vm978, %vm979
    %v981 = vsel %vm980, %v972, %v977
    %v982 = vrsqrt.pop %v971
    %v983 = vmul.f32 %v982, %v971
    %v984 = vmul.f32 %v983, %v982
    %v985 = vmul.f32 0.5, %v984
    %v986 = vsub.f32 1.5, %v985
    %v987 = vmul.f32 %v982, %v986
    %vm988 = vweird.f32 %v971
    %vm989 = vweird.f32 %v982
    %vm990 = vmor %vm988, %vm989
    %v991 = vsel %vm990, %v982, %v987
    %v992 = vmul.f32 %v958, %v981
    %v993 = vmul.f32 %v959, %v991
    %v995 = vperm.slane %v947, 0
    %v997 = vmul.f32 %v992, %v995
    %v998 = vmul.f32 %v993, %v995
    %v1000 = vperm.slane %v949, 0
    %v1002 = vadd.f32 %v997, %v1000
    %v1003 = vadd.f32 %v998, %v1000
    %s1004 = scalar_lea.vmem %s4, 32
    %v1005 = vld [vmem:[%s1004] sm:$0xff]
    %v1006 = vld [vmem:[%s1004 + $0x8] sm:$0xff]
    %v1007 = vld [vmem:[%s1004 + $0x10] sm:$0xff]
    %v1008 = vld [vmem:[%s1004 + $0x18] sm:$0xff]
    %s1009 = scalar_lea.vmem %s5, 1
    %v1010 = vld [vmem:[%s1009] sm:$0x1]
    %v1012 = vperm.slane %v1010, 0
    %v1015 = vsel %vm77, %v1002, 0
    %v1018 = vsel %vm77, %v1003, 0
    %1020 = vmatpush.msra.mxu0 0.0
    %1021 = vmatpush.msra.mxu0 0.0
    %1022 = vmatpush.msra.mxu0 0.0
    %1023 = vmatpush.msra.mxu0 0.0
    %1024 = vmatpush.msra.mxu0 0.0
    %1025 = vmatpush.msra.mxu0 0.0
    %1026 = vmatpush.msra.mxu0 0.0
    %1027 = vmatpush.msra.mxu0 0.0
    %1028 = vmatpush.msra.mxu0 0.0
    %1029 = vmatpush.msra.mxu0 0.0
    %1030 = vmatpush.msra.mxu0 0.0
    %1031 = vmatpush.msra.mxu0 0.0
    %1032 = vmatpush.msra.mxu0 %v1008
    %1033 = vmatpush.msra.mxu0 %v1007
    %1034 = vmatpush.msra.mxu0 %v1006
    %1035 = vmatpush.msra.mxu0 %v1005
    %1036 = vmatmul.f32.gmra.mxu0 %v1015
    %v1037 = vpop.f32.mrf.mxu0
    %v1038 = vadd.f32 %v1012, %v1037
    %1039 = vmatmul.f32.gmra.mxu0 %v1018
    %v1040 = vpop.f32.mrf.mxu0
    %v1041 = vadd.f32 %v1012, %v1040
    %1042 = vdwg.mxu0
    %s1043 = scalar_lea.vmem %s6, 32
    %v1044 = vld [vmem:[%s1043] sm:$0xff]
    %v1045 = vld [vmem:[%s1043 + $0x8] sm:$0xff]
    %v1046 = vld [vmem:[%s1043 + $0x10] sm:$0xff]
    %v1047 = vld [vmem:[%s1043 + $0x18] sm:$0xff]
    %s1048 = scalar_lea.vmem %s7, 1
    %v1049 = vld [vmem:[%s1048] sm:$0x1]
    %v1051 = vperm.slane %v1049, 0
    %1053 = vmatpush.msra.mxu0 0.0
    %1054 = vmatpush.msra.mxu0 0.0
    %1055 = vmatpush.msra.mxu0 0.0
    %1056 = vmatpush.msra.mxu0 0.0
    %1057 = vmatpush.msra.mxu0 0.0
    %1058 = vmatpush.msra.mxu0 0.0
    %1059 = vmatpush.msra.mxu0 0.0
    %1060 = vmatpush.msra.mxu0 0.0
    %1061 = vmatpush.msra.mxu0 0.0
    %1062 = vmatpush.msra.mxu0 0.0
    %1063 = vmatpush.msra.mxu0 0.0
    %1064 = vmatpush.msra.mxu0 0.0
    %1065 = vmatpush.msra.mxu0 %v1047
    %1066 = vmatpush.msra.mxu0 %v1046
    %1067 = vmatpush.msra.mxu0 %v1045
    %1068 = vmatpush.msra.mxu0 %v1044
    %1069 = vmatmul.f32.gmra.mxu0 %v1015
    %v1070 = vpop.f32.mrf.mxu0
    %v1071 = vadd.f32 %v1051, %v1070
    %1072 = vmatmul.f32.gmra.mxu0 %v1018
    %v1073 = vpop.f32.mrf.mxu0
    %v1074 = vadd.f32 %v1051, %v1073
    %1075 = vdwg.mxu0
    %s1076 = scalar_lea.vmem %s8, 32
    %v1077 = vld [vmem:[%s1076] sm:$0xff]
    %v1078 = vld [vmem:[%s1076 + $0x8] sm:$0xff]
    %v1079 = vld [vmem:[%s1076 + $0x10] sm:$0xff]
    %v1080 = vld [vmem:[%s1076 + $0x18] sm:$0xff]
    %s1081 = scalar_lea.vmem %s9, 1
    %v1082 = vld [vmem:[%s1081] sm:$0x1]
    %v1084 = vperm.slane %v1082, 0
    %1086 = vmatpush.msra.mxu0 0.0
    %1087 = vmatpush.msra.mxu0 0.0
    %1088 = vmatpush.msra.mxu0 0.0
    %1089 = vmatpush.msra.mxu0 0.0
    %1090 = vmatpush.msra.mxu0 0.0
    %1091 = vmatpush.msra.mxu0 0.0
    %1092 = vmatpush.msra.mxu0 0.0
    %1093 = vmatpush.msra.mxu0 0.0
    %1094 = vmatpush.msra.mxu0 0.0
    %1095 = vmatpush.msra.mxu0 0.0
    %1096 = vmatpush.msra.mxu0 0.0
    %1097 = vmatpush.msra.mxu0 0.0
    %1098 = vmatpush.msra.mxu0 %v1080
    %1099 = vmatpush.msra.mxu0 %v1079
    %1100 = vmatpush.msra.mxu0 %v1078
    %1101 = vmatpush.msra.mxu0 %v1077
    %1102 = vmatmul.f32.gmra.mxu0 %v1015
    %v1103 = vpop.f32.mrf.mxu0
    %v1104 = vadd.f32 %v1084, %v1103
    %1105 = vmatmul.f32.gmra.mxu0 %v1018
    %v1106 = vpop.f32.mrf.mxu0
    %v1107 = vadd.f32 %v1084, %v1106
    %1108 = vdwg.mxu0
    %1110 = vrot.lane.b32.xlu0 %v1038, 120
    %v1111 = vpop.permute.xlu0 %1110
    %1113 = vrot.lane.b32.xlu0 %v1041, 120
    %v1114 = vpop.permute.xlu0 %1113
    %1115 = vrot.lane.b32.xlu0 %v1038, 112
    %v1116 = vpop.permute.xlu0 %1115
    %1117 = vrot.lane.b32.xlu0 %v1111, 112
    %v1118 = vpop.permute.xlu0 %1117
    %1119 = vrot.lane.b32.xlu0 %v1041, 112
    %v1120 = vpop.permute.xlu0 %1119
    %1121 = vrot.lane.b32.xlu0 %v1114, 112
    %v1122 = vpop.permute.xlu0 %1121
    %1124 = vrot.lane.b32.xlu0 %v1071, 120
    %v1125 = vpop.permute.xlu0 %1124
    %1127 = vrot.lane.b32.xlu0 %v1074, 120
    %v1128 = vpop.permute.xlu0 %1127
    %1130 = vrot.lane.b32.xlu0 %v1104, 120
    %v1131 = vpop.permute.xlu0 %1130
    %1134 = vrot.lane.b32.xlu0 %v1107, 120
    %v1135 = vpop.permute.xlu0 %1134
    %v1137 = vsel %vm266, %v1038, 0
    %v1139 = vsel %vm266, %v1111, 0
    %v1141 = vsel %vm266, %v1071, 0
    %1143 = vmatpush.xpose.msra.mxu0 0.0
    %1144 = vmatpush.xpose.msra.mxu0 0.0
    %1145 = vmatpush.xpose.msra.mxu0 0.0
    %1146 = vmatpush.xpose.msra.mxu0 0.0
    %1147 = vmatpush.xpose.msra.mxu0 0.0
    %1148 = vmatpush.xpose.msra.mxu0 0.0
    %1149 = vmatpush.xpose.msra.mxu0 0.0
    %1150 = vmatpush.xpose.msra.mxu0 0.0
    %1151 = vmatpush.xpose.msra.mxu0 0.0
    %1152 = vmatpush.xpose.msra.mxu0 0.0
    %1153 = vmatpush.xpose.msra.mxu0 0.0
    %1154 = vmatpush.xpose.msra.mxu0 0.0
    %1155 = vmatpush.xpose.msra.mxu0 0.0
    %1156 = vmatpush.xpose.msra.mxu0 0.0
    %1157 = vmatpush.xpose.msra.mxu0 0.0
    %1158 = vmatpush.xpose.msra.mxu0 %v1141
    %1159 = vmatmul.f32.gmra.mxu0 %v1137
    %v1160 = vpop.f32.mrf.mxu0
    %v1161 = vadd.f32 0.0, %v1160
    %1162 = vmatmul.f32.gmra.mxu0 %v1139
    %v1163 = vpop.f32.mrf.mxu0
    %v1164 = vadd.f32 0.0, %v1163
    %1165 = vdwg.mxu0
    %v1166 = vsel %vm266, %v1116, 0
    %v1168 = vsel %vm266, %v1118, 0
    %v1170 = vsel %vm266, %v1125, 0
    %1172 = vmatpush.xpose.msra.mxu0 0.0
    %1173 = vmatpush.xpose.msra.mxu0 0.0
    %1174 = vmatpush.xpose.msra.mxu0 0.0
    %1175 = vmatpush.xpose.msra.mxu0 0.0
    %1176 = vmatpush.xpose.msra.mxu0 0.0
    %1177 = vmatpush.xpose.msra.mxu0 0.0
    %1178 = vmatpush.xpose.msra.mxu0 0.0
    %1179 = vmatpush.xpose.msra.mxu0 0.0
    %1180 = vmatpush.xpose.msra.mxu0 0.0
    %1181 = vmatpush.xpose.msra.mxu0 0.0
    %1182 = vmatpush.xpose.msra.mxu0 0.0
    %1183 = vmatpush.xpose.msra.mxu0 0.0
    %1184 = vmatpush.xpose.msra.mxu0 0.0
    %1185 = vmatpush.xpose.msra.mxu0 0.0
    %1186 = vmatpush.xpose.msra.mxu0 0.0
    %1187 = vmatpush.xpose.msra.mxu0 %v1170
    %1188 = vmatmul.f32.gmra.mxu0 %v1166
    %v1189 = vpop.f32.mrf.mxu0
    %v1190 = vadd.f32 0.0, %v1189
    %1191 = vmatmul.f32.gmra.mxu0 %v1168
    %v1192 = vpop.f32.mrf.mxu0
    %v1193 = vadd.f32 0.0, %v1192
    %1194 = vdwg.mxu0
    %v1195 = vsel %vm266, %v1041, 0
    %v1197 = vsel %vm266, %v1114, 0
    %v1199 = vsel %vm266, %v1074, 0
    %1201 = vmatpush.xpose.msra.mxu0 0.0
    %1202 = vmatpush.xpose.msra.mxu0 0.0
    %1203 = vmatpush.xpose.msra.mxu0 0.0
    %1204 = vmatpush.xpose.msra.mxu0 0.0
    %1205 = vmatpush.xpose.msra.mxu0 0.0
    %1206 = vmatpush.xpose.msra.mxu0 0.0
    %1207 = vmatpush.xpose.msra.mxu0 0.0
    %1208 = vmatpush.xpose.msra.mxu0 0.0
    %1209 = vmatpush.xpose.msra.mxu0 0.0
    %1210 = vmatpush.xpose.msra.mxu0 0.0
    %1211 = vmatpush.xpose.msra.mxu0 0.0
    %1212 = vmatpush.xpose.msra.mxu0 0.0
    %1213 = vmatpush.xpose.msra.mxu0 0.0
    %1214 = vmatpush.xpose.msra.mxu0 0.0
    %1215 = vmatpush.xpose.msra.mxu0 0.0
    %1216 = vmatpush.xpose.msra.mxu0 %v1199
    %1217 = vmatmul.f32.gmra.mxu0 %v1195
    %v1218 = vpop.f32.mrf.mxu0
    %v1219 = vadd.f32 0.0, %v1218
    %1220 = vmatmul.f32.gmra.mxu0 %v1197
    %v1221 = vpop.f32.mrf.mxu0
    %v1222 = vadd.f32 0.0, %v1221
    %1223 = vdwg.mxu0
    %v1224 = vsel %vm266, %v1120, 0
    %v1226 = vsel %vm266, %v1122, 0
    %v1228 = vsel %vm266, %v1128, 0
    %1230 = vmatpush.xpose.msra.mxu0 0.0
    %1231 = vmatpush.xpose.msra.mxu0 0.0
    %1232 = vmatpush.xpose.msra.mxu0 0.0
    %1233 = vmatpush.xpose.msra.mxu0 0.0
    %1234 = vmatpush.xpose.msra.mxu0 0.0
    %1235 = vmatpush.xpose.msra.mxu0 0.0
    %1236 = vmatpush.xpose.msra.mxu0 0.0
    %1237 = vmatpush.xpose.msra.mxu0 0.0
    %1238 = vmatpush.xpose.msra.mxu0 0.0
    %1239 = vmatpush.xpose.msra.mxu0 0.0
    %1240 = vmatpush.xpose.msra.mxu0 0.0
    %1241 = vmatpush.xpose.msra.mxu0 0.0
    %1242 = vmatpush.xpose.msra.mxu0 0.0
    %1243 = vmatpush.xpose.msra.mxu0 0.0
    %1244 = vmatpush.xpose.msra.mxu0 0.0
    %1245 = vmatpush.xpose.msra.mxu0 %v1228
    %1246 = vmatmul.f32.gmra.mxu0 %v1224
    %v1247 = vpop.f32.mrf.mxu0
    %v1248 = vadd.f32 0.0, %v1247
    %1249 = vmatmul.f32.gmra.mxu0 %v1226
    %v1250 = vpop.f32.mrf.mxu0
    %v1251 = vadd.f32 0.0, %v1250
    %1252 = vdwg.mxu0
    %v1253 = vmul.f32 %v1161, 0.35355338
    %v1254 = vmul.f32 %v1164, 0.35355338
    %v1255 = vmul.f32 %v1190, 0.35355338
    %v1256 = vmul.f32 %v1193, 0.35355338
    %v1257 = vmul.f32 %v1219, 0.35355338
    %v1258 = vmul.f32 %v1222, 0.35355338
    %v1259 = vmul.f32 %v1248, 0.35355338
    %v1260 = vmul.f32 %v1251, 0.35355338
    %v1261 = vadd.f32 %v1253, %v67
    %v1262 = vadd.f32 %v1254, %v68
    %v1263 = vadd.f32 %v1255, %v69
    %v1264 = vadd.f32 %v1256, %v70
    %v1265 = vadd.f32 %v1257, %v71
    %v1266 = vadd.f32 %v1258, %v72
    %v1267 = vadd.f32 %v1259, %v73
    %v1268 = vadd.f32 %v1260, %v74
    %v1269 = vsel %vm266, %v1261, -inf
    %1270 = vmax.xlane.f32.xlu0 %v1269
    %v1271 = vpop.xlane.xlu0 %1270
    %v1272 = vsel %vm266, %v1262, -inf
    %1273 = vmax.xlane.f32.xlu0 %v1272
    %v1274 = vpop.xlane.xlu0 %1273
    %v1275 = vsel %vm266, %v1263, -inf
    %1276 = vmax.xlane.f32.xlu0 %v1275
    %v1277 = vpop.xlane.xlu0 %1276
    %v1278 = vsel %vm266, %v1264, -inf
    %1279 = vmax.xlane.f32.xlu0 %v1278
    %v1280 = vpop.xlane.xlu0 %1279
    %v1281 = vsel %vm266, %v1265, -inf
    %1282 = vmax.xlane.f32.xlu0 %v1281
    %v1283 = vpop.xlane.xlu0 %1282
    %v1284 = vsel %vm266, %v1266, -inf
    %1285 = vmax.xlane.f32.xlu0 %v1284
    %v1286 = vpop.xlane.xlu0 %1285
    %v1287 = vsel %vm266, %v1267, -inf
    %1288 = vmax.xlane.f32.xlu0 %v1287
    %v1289 = vpop.xlane.xlu0 %1288
    %v1290 = vsel %vm266, %v1268, -inf
    %1291 = vmax.xlane.f32.xlu0 %v1290
    %v1292 = vpop.xlane.xlu0 %1291
    %v1293 = vsub.f32 %v1261, %v1271
    %v1294 = vsub.f32 %v1262, %v1274
    %v1295 = vsub.f32 %v1263, %v1277
    %v1296 = vsub.f32 %v1264, %v1280
    %v1297 = vsub.f32 %v1265, %v1283
    %v1298 = vsub.f32 %v1266, %v1286
    %v1299 = vsub.f32 %v1267, %v1289
    %v1300 = vsub.f32 %v1268, %v1292
    %v1301 = vmul.f32 %v1293, 1.442695
    %v1302 = vpow.pop %v1301
    %v1303 = vmul.f32 %v1294, 1.442695
    %v1304 = vpow.pop %v1303
    %v1305 = vmul.f32 %v1295, 1.442695
    %v1306 = vpow.pop %v1305
    %v1307 = vmul.f32 %v1296, 1.442695
    %v1308 = vpow.pop %v1307
    %v1309 = vmul.f32 %v1297, 1.442695
    %v1310 = vpow.pop %v1309
    %v1311 = vmul.f32 %v1298, 1.442695
    %v1312 = vpow.pop %v1311
    %v1313 = vmul.f32 %v1299, 1.442695
    %v1314 = vpow.pop %v1313
    %v1315 = vmul.f32 %v1300, 1.442695
    %v1316 = vpow.pop %v1315
    %v1317 = vsel %vm266, %v1302, 0.0
    %1318 = vadd.xlane.f32.xlu0 %v1317
    %v1319 = vpop.xlane.xlu0 %1318
    %v1320 = vsel %vm266, %v1304, 0.0
    %1321 = vadd.xlane.f32.xlu0 %v1320
    %v1322 = vpop.xlane.xlu0 %1321
    %v1323 = vsel %vm266, %v1306, 0.0
    %1324 = vadd.xlane.f32.xlu0 %v1323
    %v1325 = vpop.xlane.xlu0 %1324
    %v1326 = vsel %vm266, %v1308, 0.0
    %1327 = vadd.xlane.f32.xlu0 %v1326
    %v1328 = vpop.xlane.xlu0 %1327
    %v1329 = vsel %vm266, %v1310, 0.0
    %1330 = vadd.xlane.f32.xlu0 %v1329
    %v1331 = vpop.xlane.xlu0 %1330
    %v1332 = vsel %vm266, %v1312, 0.0
    %1333 = vadd.xlane.f32.xlu0 %v1332
    %v1334 = vpop.xlane.xlu0 %1333
    %v1335 = vsel %vm266, %v1314, 0.0
    %1336 = vadd.xlane.f32.xlu0 %v1335
    %v1337 = vpop.xlane.xlu0 %1336
    %v1338 = vsel %vm266, %v1316, 0.0
    %1339 = vadd.xlane.f32.xlu0 %v1338
    %v1340 = vpop.xlane.xlu0 %1339
    %v1341 = vrcp.pop %v1319
    %v1342 = vrcp.pop %v1322
    %v1343 = vrcp.pop %v1325
    %v1344 = vrcp.pop %v1328
    %v1345 = vrcp.pop %v1331
    %v1346 = vrcp.pop %v1334
    %v1347 = vrcp.pop %v1337
    %v1348 = vrcp.pop %v1340
    %v1349 = vmul.f32 %v1302, %v1341
    %v1350 = vmul.f32 %v1304, %v1342
    %v1351 = vmul.f32 %v1306, %v1343
    %v1352 = vmul.f32 %v1308, %v1344
    %v1353 = vmul.f32 %v1310, %v1345
    %v1354 = vmul.f32 %v1312, %v1346
    %v1355 = vmul.f32 %v1314, %v1347
    %v1356 = vmul.f32 %v1316, %v1348
    %s1357 = scalar_lea.vmem %s20, 64
    %1358 = vst.msk [vmem:[%s1357] sm:$0xff] %vm266, %v1349
    %1359 = vst.msk [vmem:[%s1357 + $0x8] sm:$0xff] %vm266, %v1350
    %1360 = vst.msk [vmem:[%s1357 + $0x10] sm:$0xff] %vm266, %v1351
    %1361 = vst.msk [vmem:[%s1357 + $0x18] sm:$0xff] %vm266, %v1352
    %1362 = vst.msk [vmem:[%s1357 + $0x20] sm:$0xff] %vm266, %v1353
    %1363 = vst.msk [vmem:[%s1357 + $0x28] sm:$0xff] %vm266, %v1354
    %1364 = vst.msk [vmem:[%s1357 + $0x30] sm:$0xff] %vm266, %v1355
    %1365 = vst.msk [vmem:[%s1357 + $0x38] sm:$0xff] %vm266, %v1356
    %v1367 = vsel %vm266, %v1349, 0
    %v1370 = vsel %vm266, %v1350, 0
    %1372 = vmatpush.msra.mxu0 0.0
    %1373 = vmatpush.msra.mxu0 0.0
    %1374 = vmatpush.msra.mxu0 0.0
    %1375 = vmatpush.msra.mxu0 0.0
    %1376 = vmatpush.msra.mxu0 0.0
    %1377 = vmatpush.msra.mxu0 0.0
    %1378 = vmatpush.msra.mxu0 0.0
    %1379 = vmatpush.msra.mxu0 0.0
    %1380 = vmatpush.msra.mxu0 0.0
    %1381 = vmatpush.msra.mxu0 0.0
    %1382 = vmatpush.msra.mxu0 0.0
    %1383 = vmatpush.msra.mxu0 0.0
    %1384 = vmatpush.msra.mxu0 0.0
    %1385 = vmatpush.msra.mxu0 0.0
    %1386 = vmatpush.msra.mxu0 0.0
    %1387 = vmatpush.msra.mxu0 %v1104
    %1388 = vmatmul.f32.gmra.mxu0 %v1367
    %v1389 = vpop.f32.mrf.mxu0
    %v1390 = vadd.f32 0.0, %v1389
    %1391 = vmatmul.f32.gmra.mxu0 %v1370
    %v1392 = vpop.f32.mrf.mxu0
    %v1393 = vadd.f32 0.0, %v1392
    %1394 = vdwg.mxu0
    %v1396 = vsel %vm266, %v1351, 0
    %v1399 = vsel %vm266, %v1352, 0
    %1401 = vmatpush.msra.mxu0 0.0
    %1402 = vmatpush.msra.mxu0 0.0
    %1403 = vmatpush.msra.mxu0 0.0
    %1404 = vmatpush.msra.mxu0 0.0
    %1405 = vmatpush.msra.mxu0 0.0
    %1406 = vmatpush.msra.mxu0 0.0
    %1407 = vmatpush.msra.mxu0 0.0
    %1408 = vmatpush.msra.mxu0 0.0
    %1409 = vmatpush.msra.mxu0 0.0
    %1410 = vmatpush.msra.mxu0 0.0
    %1411 = vmatpush.msra.mxu0 0.0
    %1412 = vmatpush.msra.mxu0 0.0
    %1413 = vmatpush.msra.mxu0 0.0
    %1414 = vmatpush.msra.mxu0 0.0
    %1415 = vmatpush.msra.mxu0 0.0
    %1416 = vmatpush.msra.mxu0 %v1131
    %1417 = vmatmul.f32.gmra.mxu0 %v1396
    %v1418 = vpop.f32.mrf.mxu0
    %v1419 = vadd.f32 0.0, %v1418
    %1420 = vmatmul.f32.gmra.mxu0 %v1399
    %v1421 = vpop.f32.mrf.mxu0
    %v1422 = vadd.f32 0.0, %v1421
    %1423 = vdwg.mxu0
    %v1425 = vsel %vm266, %v1353, 0
    %v1428 = vsel %vm266, %v1354, 0
    %1430 = vmatpush.msra.mxu0 0.0
    %1431 = vmatpush.msra.mxu0 0.0
    %1432 = vmatpush.msra.mxu0 0.0
    %1433 = vmatpush.msra.mxu0 0.0
    %1434 = vmatpush.msra.mxu0 0.0
    %1435 = vmatpush.msra.mxu0 0.0
    %1436 = vmatpush.msra.mxu0 0.0
    %1437 = vmatpush.msra.mxu0 0.0
    %1438 = vmatpush.msra.mxu0 0.0
    %1439 = vmatpush.msra.mxu0 0.0
    %1440 = vmatpush.msra.mxu0 0.0
    %1441 = vmatpush.msra.mxu0 0.0
    %1442 = vmatpush.msra.mxu0 0.0
    %1443 = vmatpush.msra.mxu0 0.0
    %1444 = vmatpush.msra.mxu0 0.0
    %1445 = vmatpush.msra.mxu0 %v1107
    %1446 = vmatmul.f32.gmra.mxu0 %v1425
    %v1447 = vpop.f32.mrf.mxu0
    %v1448 = vadd.f32 0.0, %v1447
    %1449 = vmatmul.f32.gmra.mxu0 %v1428
    %v1450 = vpop.f32.mrf.mxu0
    %v1451 = vadd.f32 0.0, %v1450
    %1452 = vdwg.mxu0
    %v1454 = vsel %vm266, %v1355, 0
    %v1457 = vsel %vm266, %v1356, 0
    %1459 = vmatpush.msra.mxu0 0.0
    %1460 = vmatpush.msra.mxu0 0.0
    %1461 = vmatpush.msra.mxu0 0.0
    %1462 = vmatpush.msra.mxu0 0.0
    %1463 = vmatpush.msra.mxu0 0.0
    %1464 = vmatpush.msra.mxu0 0.0
    %1465 = vmatpush.msra.mxu0 0.0
    %1466 = vmatpush.msra.mxu0 0.0
    %1467 = vmatpush.msra.mxu0 0.0
    %1468 = vmatpush.msra.mxu0 0.0
    %1469 = vmatpush.msra.mxu0 0.0
    %1470 = vmatpush.msra.mxu0 0.0
    %1471 = vmatpush.msra.mxu0 0.0
    %1472 = vmatpush.msra.mxu0 0.0
    %1473 = vmatpush.msra.mxu0 0.0
    %1474 = vmatpush.msra.mxu0 %v1135
    %1475 = vmatmul.f32.gmra.mxu0 %v1454
    %v1476 = vpop.f32.mrf.mxu0
    %v1477 = vadd.f32 0.0, %v1476
    %1478 = vmatmul.f32.gmra.mxu0 %v1457
    %v1479 = vpop.f32.mrf.mxu0
    %v1480 = vadd.f32 0.0, %v1479
    %1481 = vdwg.mxu0
    %s1482 = scalar_lea.vmem %s11, 1
    %v1483 = vld [vmem:[%s1482] sm:$0x1]
    %s1484 = scalar_lea.vmem %s10, 32
    %v1485 = vld [vmem:[%s1484] sm:$0xff]
    %v1487 = vsel %vm266, %v1390, 0
    %v1490 = vsel %vm266, %v1448, 0
    %1492 = vmatpush.msra.mxu0 0.0
    %1493 = vmatpush.msra.mxu0 0.0
    %1494 = vmatpush.msra.mxu0 0.0
    %1495 = vmatpush.msra.mxu0 0.0
    %1496 = vmatpush.msra.mxu0 0.0
    %1497 = vmatpush.msra.mxu0 0.0
    %1498 = vmatpush.msra.mxu0 0.0
    %1499 = vmatpush.msra.mxu0 0.0
    %1500 = vmatpush.msra.mxu0 0.0
    %1501 = vmatpush.msra.mxu0 0.0
    %1502 = vmatpush.msra.mxu0 0.0
    %1503 = vmatpush.msra.mxu0 0.0
    %1504 = vmatpush.msra.mxu0 0.0
    %1505 = vmatpush.msra.mxu0 0.0
    %1506 = vmatpush.msra.mxu0 0.0
    %1507 = vmatpush.msra.mxu0 %v1485
    %1508 = vmatmul.f32.gmra.mxu0 %v1487
    %v1509 = vpop.f32.mrf.mxu0
    %v1510 = vadd.f32 0.0, %v1509
    %1511 = vmatmul.f32.gmra.mxu0 %v1490
    %v1512 = vpop.f32.mrf.mxu0
    %v1513 = vadd.f32 0.0, %v1512
    %1514 = vdwg.mxu0
    %v1516 = vperm.slane %v1483, 0
    %v1518 = vadd.f32 %v1516, %v1510
    %v1519 = vadd.f32 %v1516, %v1513
    %s1520 = scalar_lea.vmem %s10, 40
    %v1521 = vld [vmem:[%s1520] sm:$0xff]
    %v1523 = vsel %vm266, %v1393, 0
    %v1526 = vsel %vm266, %v1451, 0
    %1528 = vmatpush.msra.mxu0 0.0
    %1529 = vmatpush.msra.mxu0 0.0
    %1530 = vmatpush.msra.mxu0 0.0
    %1531 = vmatpush.msra.mxu0 0.0
    %1532 = vmatpush.msra.mxu0 0.0
    %1533 = vmatpush.msra.mxu0 0.0
    %1534 = vmatpush.msra.mxu0 0.0
    %1535 = vmatpush.msra.mxu0 0.0
    %1536 = vmatpush.msra.mxu0 0.0
    %1537 = vmatpush.msra.mxu0 0.0
    %1538 = vmatpush.msra.mxu0 0.0
    %1539 = vmatpush.msra.mxu0 0.0
    %1540 = vmatpush.msra.mxu0 0.0
    %1541 = vmatpush.msra.mxu0 0.0
    %1542 = vmatpush.msra.mxu0 0.0
    %1543 = vmatpush.msra.mxu0 %v1521
    %1544 = vmatmul.f32.gmra.mxu0 %v1523
    %v1545 = vpop.f32.mrf.mxu0
    %v1546 = vadd.f32 0.0, %v1545
    %1547 = vmatmul.f32.gmra.mxu0 %v1526
    %v1548 = vpop.f32.mrf.mxu0
    %v1549 = vadd.f32 0.0, %v1548
    %1550 = vdwg.mxu0
    %v1551 = vadd.f32 %v1518, %v1546
    %v1552 = vadd.f32 %v1519, %v1549
    %s1553 = scalar_lea.vmem %s10, 48
    %v1554 = vld [vmem:[%s1553] sm:$0xff]
    %v1556 = vsel %vm266, %v1419, 0
    %v1559 = vsel %vm266, %v1477, 0
    %1561 = vmatpush.msra.mxu0 0.0
    %1562 = vmatpush.msra.mxu0 0.0
    %1563 = vmatpush.msra.mxu0 0.0
    %1564 = vmatpush.msra.mxu0 0.0
    %1565 = vmatpush.msra.mxu0 0.0
    %1566 = vmatpush.msra.mxu0 0.0
    %1567 = vmatpush.msra.mxu0 0.0
    %1568 = vmatpush.msra.mxu0 0.0
    %1569 = vmatpush.msra.mxu0 0.0
    %1570 = vmatpush.msra.mxu0 0.0
    %1571 = vmatpush.msra.mxu0 0.0
    %1572 = vmatpush.msra.mxu0 0.0
    %1573 = vmatpush.msra.mxu0 0.0
    %1574 = vmatpush.msra.mxu0 0.0
    %1575 = vmatpush.msra.mxu0 0.0
    %1576 = vmatpush.msra.mxu0 %v1554
    %1577 = vmatmul.f32.gmra.mxu0 %v1556
    %v1578 = vpop.f32.mrf.mxu0
    %v1579 = vadd.f32 0.0, %v1578
    %1580 = vmatmul.f32.gmra.mxu0 %v1559
    %v1581 = vpop.f32.mrf.mxu0
    %v1582 = vadd.f32 0.0, %v1581
    %1583 = vdwg.mxu0
    %v1584 = vadd.f32 %v1551, %v1579
    %v1585 = vadd.f32 %v1552, %v1582
    %s1586 = scalar_lea.vmem %s10, 56
    %v1587 = vld [vmem:[%s1586] sm:$0xff]
    %v1589 = vsel %vm266, %v1422, 0
    %v1592 = vsel %vm266, %v1480, 0
    %1594 = vmatpush.msra.mxu0 0.0
    %1595 = vmatpush.msra.mxu0 0.0
    %1596 = vmatpush.msra.mxu0 0.0
    %1597 = vmatpush.msra.mxu0 0.0
    %1598 = vmatpush.msra.mxu0 0.0
    %1599 = vmatpush.msra.mxu0 0.0
    %1600 = vmatpush.msra.mxu0 0.0
    %1601 = vmatpush.msra.mxu0 0.0
    %1602 = vmatpush.msra.mxu0 0.0
    %1603 = vmatpush.msra.mxu0 0.0
    %1604 = vmatpush.msra.mxu0 0.0
    %1605 = vmatpush.msra.mxu0 0.0
    %1606 = vmatpush.msra.mxu0 0.0
    %1607 = vmatpush.msra.mxu0 0.0
    %1608 = vmatpush.msra.mxu0 0.0
    %1609 = vmatpush.msra.mxu0 %v1587
    %1610 = vmatmul.f32.gmra.mxu0 %v1589
    %v1611 = vpop.f32.mrf.mxu0
    %v1612 = vadd.f32 0.0, %v1611
    %1613 = vmatmul.f32.gmra.mxu0 %v1592
    %v1614 = vpop.f32.mrf.mxu0
    %v1615 = vadd.f32 0.0, %v1614
    %1616 = vdwg.mxu0
    %v1617 = vadd.f32 %v1584, %v1612
    %v1618 = vadd.f32 %v1585, %v1615
    %v1619 = vadd.f32 %v944, %v1617
    %v1620 = vadd.f32 %v945, %v1618
    %s1621 = scalar_lea.vmem %s12, 1
    %v1622 = vld [vmem:[%s1621] sm:$0x1]
    %s1623 = scalar_lea.vmem %s13, 1
    %v1624 = vld [vmem:[%s1623] sm:$0x1]
    %v1625 = vsel %vm77, %v1619, 0.0
    %1626 = vadd.xlane.f32.xlu0 %v1625
    %v1627 = vpop.xlane.xlu0 %1626
    %v1628 = vsel %vm77, %v1620, 0.0
    %1629 = vadd.xlane.f32.xlu0 %v1628
    %v1630 = vpop.xlane.xlu0 %1629
    %v1631 = vmul.f32 %v1627, %v90
    %v1632 = vmul.f32 %v1630, %v90
    %v1633 = vsub.f32 %v1619, %v1631
    %v1634 = vsub.f32 %v1620, %v1632
    %v1635 = vmul.f32 %v1633, %v1633
    %v1636 = vmul.f32 %v1634, %v1634
    %v1637 = vsel %vm77, %v1635, 0.0
    %1638 = vadd.xlane.f32.xlu0 %v1637
    %v1639 = vpop.xlane.xlu0 %1638
    %v1640 = vsel %vm77, %v1636, 0.0
    %1641 = vadd.xlane.f32.xlu0 %v1640
    %v1642 = vpop.xlane.xlu0 %1641
    %v1643 = vmul.f32 %v1639, %v90
    %v1644 = vmul.f32 %v1642, %v90
    %v1645 = vadd.f32 %v1643, 1e-05
    %v1646 = vadd.f32 %v1644, 1e-05
    %v1647 = vrsqrt.pop %v1645
    %v1648 = vmul.f32 %v1647, %v1645
    %v1649 = vmul.f32 %v1648, %v1647
    %v1650 = vmul.f32 0.5, %v1649
    %v1651 = vsub.f32 1.5, %v1650
    %v1652 = vmul.f32 %v1647, %v1651
    %vm1653 = vweird.f32 %v1645
    %vm1654 = vweird.f32 %v1647
    %vm1655 = vmor %vm1653, %vm1654
    %v1656 = vsel %vm1655, %v1647, %v1652
    %v1657 = vrsqrt.pop %v1646
    %v1658 = vmul.f32 %v1657, %v1646
    %v1659 = vmul.f32 %v1658, %v1657
    %v1660 = vmul.f32 0.5, %v1659
    %v1661 = vsub.f32 1.5, %v1660
    %v1662 = vmul.f32 %v1657, %v1661
    %vm1663 = vweird.f32 %v1646
    %vm1664 = vweird.f32 %v1657
    %vm1665 = vmor %vm1663, %vm1664
    %v1666 = vsel %vm1665, %v1657, %v1662
    %v1667 = vmul.f32 %v1633, %v1656
    %v1668 = vmul.f32 %v1634, %v1666
    %v1670 = vperm.slane %v1622, 0
    %v1672 = vmul.f32 %v1667, %v1670
    %v1673 = vmul.f32 %v1668, %v1670
    %v1675 = vperm.slane %v1624, 0
    %v1677 = vadd.f32 %v1672, %v1675
    %v1678 = vadd.f32 %v1673, %v1675
    %s1679 = scalar_lea.vmem %s14, 32
    %v1680 = vld [vmem:[%s1679] sm:$0xff]
    %v1681 = vld [vmem:[%s1679 + $0x8] sm:$0xff]
    %v1682 = vld [vmem:[%s1679 + $0x10] sm:$0xff]
    %v1683 = vld [vmem:[%s1679 + $0x18] sm:$0xff]
    %v1685 = vsel %vm77, %v1677, 0
    %v1688 = vsel %vm77, %v1678, 0
    %1690 = vmatpush.msra.mxu0 0.0
    %1691 = vmatpush.msra.mxu0 0.0
    %1692 = vmatpush.msra.mxu0 0.0
    %1693 = vmatpush.msra.mxu0 0.0
    %1694 = vmatpush.msra.mxu0 0.0
    %1695 = vmatpush.msra.mxu0 0.0
    %1696 = vmatpush.msra.mxu0 0.0
    %1697 = vmatpush.msra.mxu0 0.0
    %1698 = vmatpush.msra.mxu0 0.0
    %1699 = vmatpush.msra.mxu0 0.0
    %1700 = vmatpush.msra.mxu0 0.0
    %1701 = vmatpush.msra.mxu0 0.0
    %1702 = vmatpush.msra.mxu0 %v1683
    %1703 = vmatpush.msra.mxu0 %v1682
    %1704 = vmatpush.msra.mxu0 %v1681
    %1705 = vmatpush.msra.mxu0 %v1680
    %1706 = vmatmul.f32.gmra.mxu0 %v1685
    %v1707 = vpop.f32.mrf.mxu0
    %v1708 = vadd.f32 0.0, %v1707
    %1709 = vmatmul.f32.gmra.mxu0 %v1688
    %v1710 = vpop.f32.mrf.mxu0
    %v1711 = vadd.f32 0.0, %v1710
    %1712 = vdwg.mxu0
    %v1713 = vxor.u32 %v1708, 2147483648
    %v1714 = vxor.u32 %v1711, 2147483648
    %v1715 = vmul.f32 %v1713, 1.442695
    %v1716 = vpow.pop %v1715
    %v1717 = vmul.f32 %v1714, 1.442695
    %v1718 = vpow.pop %v1717
    %v1719 = vadd.f32 %v1716, 1.0
    %v1720 = vadd.f32 %v1718, 1.0
    %v1721 = vrcp.pop %v1719
    %v1722 = vmul.f32 %v1719, %v1721
    %v1723 = vsub.f32 1.0, %v1722
    %v1724 = vmul.f32 %v1721, %v1723
    %v1725 = vadd.f32 %v1721, %v1724
    %vm1726 = vweird.f32 %v1719
    %vm1727 = vweird.f32 %v1721
    %vm1728 = vmor %vm1726, %vm1727
    %v1729 = vsel %vm1728, %v1721, %v1725
    %v1730 = vand.u32 2147483647, %v1719
    %vm1731 = vcmp.eq.f32.partialorder %v1730, 8.507059e+37
    %v1732 = vand.u32 %v1719, 2147483648
    %v1733 = vor.u32 1.1754944e-38, %v1732
    %v1734 = vsel %vm1731, %v1733, %v1729
    %v1735 = vmul.f32 1.0, %v1734
    %v1736 = vrcp.pop %v1720
    %v1737 = vmul.f32 %v1720, %v1736
    %v1738 = vsub.f32 1.0, %v1737
    %v1739 = vmul.f32 %v1736, %v1738
    %v1740 = vadd.f32 %v1736, %v1739
    %vm1741 = vweird.f32 %v1720
    %vm1742 = vweird.f32 %v1736
    %vm1743 = vmor %vm1741, %vm1742
    %v1744 = vsel %vm1743, %v1736, %v1740
    %v1745 = vand.u32 2147483647, %v1720
    %vm1746 = vcmp.eq.f32.partialorder %v1745, 8.507059e+37
    %v1747 = vand.u32 %v1720, 2147483648
    %v1748 = vor.u32 1.1754944e-38, %v1747
    %v1749 = vsel %vm1746, %v1748, %v1744
    %v1750 = vmul.f32 1.0, %v1749
    %v1751 = vmul.f32 %v1708, %v1735
    %v1752 = vmul.f32 %v1711, %v1750
    %s1753 = scalar_lea.vmem %s15, 32
    %v1754 = vld [vmem:[%s1753] sm:$0xff]
    %v1755 = vld [vmem:[%s1753 + $0x8] sm:$0xff]
    %v1756 = vld [vmem:[%s1753 + $0x10] sm:$0xff]
    %v1757 = vld [vmem:[%s1753 + $0x18] sm:$0xff]
    %1758 = vmatpush.msra.mxu0 0.0
    %1759 = vmatpush.msra.mxu0 0.0
    %1760 = vmatpush.msra.mxu0 0.0
    %1761 = vmatpush.msra.mxu0 0.0
    %1762 = vmatpush.msra.mxu0 0.0
    %1763 = vmatpush.msra.mxu0 0.0
    %1764 = vmatpush.msra.mxu0 0.0
    %1765 = vmatpush.msra.mxu0 0.0
    %1766 = vmatpush.msra.mxu0 0.0
    %1767 = vmatpush.msra.mxu0 0.0
    %1768 = vmatpush.msra.mxu0 0.0
    %1769 = vmatpush.msra.mxu0 0.0
    %1770 = vmatpush.msra.mxu0 %v1757
    %1771 = vmatpush.msra.mxu0 %v1756
    %1772 = vmatpush.msra.mxu0 %v1755
    %1773 = vmatpush.msra.mxu0 %v1754
    %1774 = vmatmul.f32.gmra.mxu0 %v1685
    %v1775 = vpop.f32.mrf.mxu0
    %v1776 = vadd.f32 0.0, %v1775
    %1777 = vmatmul.f32.gmra.mxu0 %v1688
    %v1778 = vpop.f32.mrf.mxu0
    %v1779 = vadd.f32 0.0, %v1778
    %1780 = vdwg.mxu0
    %v1781 = vmul.f32 %v1751, %v1776
    %v1782 = vmul.f32 %v1752, %v1779
    %s1783 = scalar_lea.vmem %s16, 64
    %v1784 = vld [vmem:[%s1783] sm:$0xff]
    %v1785 = vld [vmem:[%s1783 + $0x8] sm:$0xff]
    %v1786 = vld [vmem:[%s1783 + $0x10] sm:$0xff]
    %v1787 = vld [vmem:[%s1783 + $0x18] sm:$0xff]
    %v1788 = vld [vmem:[%s1783 + $0x20] sm:$0xff]
    %v1789 = vld [vmem:[%s1783 + $0x28] sm:$0xff]
    %v1790 = vld [vmem:[%s1783 + $0x30] sm:$0xff]
    %v1791 = vld [vmem:[%s1783 + $0x38] sm:$0xff]
    %v1793 = vsel %vm914, %v1781, 0
    %v1796 = vsel %vm914, %v1782, 0
    %1798 = vmatpush.msra.mxu0 0.0
    %1799 = vmatpush.msra.mxu0 0.0
    %1800 = vmatpush.msra.mxu0 0.0
    %1801 = vmatpush.msra.mxu0 0.0
    %1802 = vmatpush.msra.mxu0 0.0
    %1803 = vmatpush.msra.mxu0 0.0
    %1804 = vmatpush.msra.mxu0 0.0
    %1805 = vmatpush.msra.mxu0 0.0
    %1806 = vmatpush.msra.mxu0 %v1791
    %1807 = vmatpush.msra.mxu0 %v1790
    %1808 = vmatpush.msra.mxu0 %v1789
    %1809 = vmatpush.msra.mxu0 %v1788
    %1810 = vmatpush.msra.mxu0 %v1787
    %1811 = vmatpush.msra.mxu0 %v1786
    %1812 = vmatpush.msra.mxu0 %v1785
    %1813 = vmatpush.msra.mxu0 %v1784
    %1814 = vmatmul.f32.gmra.mxu0 %v1793
    %v1815 = vpop.f32.mrf.mxu0
    %v1816 = vadd.f32 0.0, %v1815
    %1817 = vmatmul.f32.gmra.mxu0 %v1796
    %v1818 = vpop.f32.mrf.mxu0
    %v1819 = vadd.f32 0.0, %v1818
    %1820 = vdwg.mxu0
    %v1821 = vadd.f32 %v1619, %v1816
    %v1822 = vadd.f32 %v1620, %v1819
    %v1823 = vld [vmem:[%s17] sm:$0x1]
    %v1824 = vld [vmem:[%s18] sm:$0x1]
    %v1825 = vsel %vm77, %v1821, 0.0
    %1826 = vadd.xlane.f32.xlu0 %v1825
    %v1827 = vpop.xlane.xlu0 %1826
    %v1828 = vsel %vm77, %v1822, 0.0
    %1829 = vadd.xlane.f32.xlu0 %v1828
    %v1830 = vpop.xlane.xlu0 %1829
    %v1831 = vmul.f32 %v1827, %v90
    %v1832 = vmul.f32 %v1830, %v90
    %v1833 = vsub.f32 %v1821, %v1831
    %v1834 = vsub.f32 %v1822, %v1832
    %v1835 = vmul.f32 %v1833, %v1833
    %v1836 = vmul.f32 %v1834, %v1834
    %v1837 = vsel %vm77, %v1835, 0.0
    %1838 = vadd.xlane.f32.xlu0 %v1837
    %v1839 = vpop.xlane.xlu0 %1838
    %v1840 = vsel %vm77, %v1836, 0.0
    %1841 = vadd.xlane.f32.xlu0 %v1840
    %v1842 = vpop.xlane.xlu0 %1841
    %v1843 = vmul.f32 %v1839, %v90
    %v1844 = vmul.f32 %v1842, %v90
    %v1845 = vadd.f32 %v1843, 1e-05
    %v1846 = vadd.f32 %v1844, 1e-05
    %v1847 = vrsqrt.pop %v1845
    %v1848 = vmul.f32 %v1847, %v1845
    %v1849 = vmul.f32 %v1848, %v1847
    %v1850 = vmul.f32 0.5, %v1849
    %v1851 = vsub.f32 1.5, %v1850
    %v1852 = vmul.f32 %v1847, %v1851
    %vm1853 = vweird.f32 %v1845
    %vm1854 = vweird.f32 %v1847
    %vm1855 = vmor %vm1853, %vm1854
    %v1856 = vsel %vm1855, %v1847, %v1852
    %v1857 = vrsqrt.pop %v1846
    %v1858 = vmul.f32 %v1857, %v1846
    %v1859 = vmul.f32 %v1858, %v1857
    %v1860 = vmul.f32 0.5, %v1859
    %v1861 = vsub.f32 1.5, %v1860
    %v1862 = vmul.f32 %v1857, %v1861
    %vm1863 = vweird.f32 %v1846
    %vm1864 = vweird.f32 %v1857
    %vm1865 = vmor %vm1863, %vm1864
    %v1866 = vsel %vm1865, %v1857, %v1862
    %v1867 = vmul.f32 %v1833, %v1856
    %v1868 = vmul.f32 %v1834, %v1866
    %v1870 = vperm.slane %v1823, 0
    %v1872 = vmul.f32 %v1867, %v1870
    %v1873 = vmul.f32 %v1868, %v1870
    %v1875 = vperm.slane %v1824, 0
    %v1877 = vadd.f32 %v1872, %v1875
    %v1878 = vadd.f32 %v1873, %v1875
    %1879 = vst.msk [vmem:[#allocation2] sm:$0xff] %vm77, %v1877
    %1880 = vst.msk [vmem:[#allocation2 + $0x8] sm:$0xff] %vm77, %v1878
    // Predicated region
    $region78: #{transformer_encoder.1} parent=1 // pred_check
      _
    $region79: #{transformer_encoder.1} parent=1 // pred_check_branch
      %1882 = sbr.rel (0) target = $region81
    $region80: #{transformer_encoder.1} parent=1 // pred_region
      %1884 = vsyncadd [#allocation3], 0
      %s1885 = sshll.u32 [#allocation2], 4
      %s1886 = int_to_ptr.vmem [resolvable:$true] %s1885
      %s1887 = sshll.u32 %s19, 4
      %s1888 = int_to_ptr.hbm [resolvable:$true] %s1887
      %1893 = dma.vmem_to_hbm [thread:$0]  %s1886, 256, %s1888, [#allocation3], 128, 128, 8
    $region81: #{transformer_encoder.1} parent=1 // pred_fallthru
      _
    // Predicated region
    $region82: #{transformer_encoder.1} parent=1 // pred_check
      _
    $region83: #{transformer_encoder.1} parent=1 // pred_check_branch
      %1895 = sbr.rel (0) target = $region85
    $region84: #{transformer_encoder.1} parent=1 // pred_region
      _
    $region85: #{transformer_encoder.1} parent=1 // pred_fallthru
      _
    // Predicated region
    $region86: #{transformer_encoder.1} parent=1 // pred_check
      _
    $region87: #{transformer_encoder.1} parent=1 // pred_check_branch
      %1897 = sbr.rel (0) target = $region89
    $region88: #{transformer_encoder.1} parent=1 // pred_region
      %1899 = dma.done [#allocation3], 256
    $region89: #{transformer_encoder.1} parent=1 // pred_fallthru
      _
    // Predicated region
    $region90: #{transformer_encoder.1} parent=1 // pred_check
      _
    $region91: #{transformer_encoder.1} parent=1 // pred_check_branch
      %1901 = sbr.rel (0) target = $region93
    $region92: #{transformer_encoder.1} parent=1 // pred_region
      _
    $region93: #{transformer_encoder.1} parent=1 // pred_fallthru
      _
    %1902 = vsyncpa [#allocation3], 1

</llo_original>
